<compile_context>
chip_gen: v7x
topology: tpu7x:2x2x1
jax: 0.10.0
libtpu: 0.0.40
codegen_flags: <defaults>
</compile_context>

<pallas_src>
import functools

import jax
import jax.numpy as jnp
from jax.experimental import pallas as pl
from jax.experimental.pallas import tpu as pltpu

BN_EPS = 1e-5


# ---------------------------------------------------------------------------
# Fused Pallas kernel
# ---------------------------------------------------------------------------
def _byol_fused_kernel(
    x_ref, wbb_ref, bbb_ref,
    pw1_ref, pb1_ref, pg_ref, pbt_ref, pw2_ref, pb2_ref,      # online projector
    qw1_ref, qb1_ref, qg_ref, qbt_ref, qw2_ref, qb2_ref,      # online predictor
    tw1_ref, tb1_ref, tg_ref, tbt_ref, tw2_ref, tb2_ref,      # target projector
    o_ref, *, B, in_dim, eps):
    # ---- Backbone: one lane-dense matmul covering all four streams ---------
    # rows [0:B] = view 1, rows [B:2B] = view 2
    # cols [0:in_dim] = online encoder, cols [in_dim:2*in_dim] = target encoder
    f = jnp.dot(x_ref[...], wbb_ref[...], preferred_element_type=jnp.float32)
    f = jnp.maximum(f + bbb_ref[...], 0.0)
    f_on = f[:, :in_dim]          # [2B, in_dim]
    f_tg = f[:, in_dim:]          # [2B, in_dim]

    def mlp_two_views(h2b, w1, b1, g, beta, w2, b2):
        # Linear (single matmul, weights shared by both views)
        h = jnp.dot(h2b, w1, preferred_element_type=jnp.float32) + b1
        # BatchNorm1d (training mode, biased var, per-view statistics) + ReLU
        def bn_relu(hv):
            m = jnp.mean(hv, axis=0, keepdims=True)
            v = jnp.mean(hv * hv, axis=0, keepdims=True) - m * m
            y = (hv - m) * jax.lax.rsqrt(v + eps)
            return jnp.maximum(y * g + beta, 0.0)
        hn = jnp.concatenate([bn_relu(h[:B]), bn_relu(h[B:])], axis=0)
        # Linear
        return jnp.dot(hn, w2, preferred_element_type=jnp.float32) + b2

    proj_on = mlp_two_views(f_on, pw1_ref[...], pb1_ref[...], pg_ref[...],
                            pbt_ref[...], pw2_ref[...], pb2_ref[...])
    pred_on = mlp_two_views(proj_on, qw1_ref[...], qb1_ref[...], qg_ref[...],
                            qbt_ref[...], qw2_ref[...], qb2_ref[...])
    proj_tg = mlp_two_views(f_tg, tw1_ref[...], tb1_ref[...], tg_ref[...],
                            tbt_ref[...], tw2_ref[...], tb2_ref[...])

    # Pack [pred1 | pred2 | tproj1 | tproj2] side-by-side -> lane-dense store.
    out = jnp.concatenate(
        [pred_on[:B], pred_on[B:], proj_tg[:B], proj_tg[B:]], axis=1)
    o_ref[...] = out.astype(o_ref.dtype)


# ---------------------------------------------------------------------------
# Wrapper
# ---------------------------------------------------------------------------
def _full_spec(shape):
    # single full-array block (grid-less call)
    return pl.BlockSpec(shape, lambda: tuple(0 for _ in shape))


def byol_forward(params, x1, x2):
    B = x1.shape[0]
    # stack views along batch: [2B, C*H*W]
    x = jnp.concatenate([x1.reshape(B, -1), x2.reshape(B, -1)], axis=0)

    wb, bb = params["backbone"]
    wbt, bbt = params["target_encoder"]
    in_dim = wb.shape[1]
    # concat online/target backbone weights along the output dim -> lane-dense N
    wbb = jnp.concatenate([wb, wbt], axis=1)                       # [CHW, 2*in_dim]
    bbb = jnp.concatenate([bb, bbt], axis=0).reshape(1, 2 * in_dim)

    def mlp_args(p):
        w1, b1, g, beta, w2, b2 = p
        H = w1.shape[1]
        Do = w2.shape[1]
        return (w1, b1.reshape(1, H), g.reshape(1, H), beta.reshape(1, H),
                w2, b2.reshape(1, Do))

    pp = mlp_args(params["online_projector"])
    qq = mlp_args(params["online_predictor"])
    tt = mlp_args(params["target_projector"])
    P = pp[4].shape[1]                                             # projection dim

    args = (x, wbb, bbb) + pp + qq + tt
    packed = pl.pallas_call(
        functools.partial(_byol_fused_kernel, B=B, in_dim=in_dim, eps=BN_EPS),
        out_shape=jax.ShapeDtypeStruct((B, 4 * P), jnp.float32),
        in_specs=[_full_spec(a.shape) for a in args],
        out_specs=_full_spec((B, 4 * P)),
        compiler_params=pltpu.CompilerParams(
            vmem_limit_bytes=32 * 1024 * 1024),
    )(*args)

    online_pred_1 = packed[:, 0 * P:1 * P]
    online_pred_2 = packed[:, 1 * P:2 * P]
    # target branch is no-grad in the reference; forward values are identical
    target_proj_1 = jax.lax.stop_gradient(packed[:, 2 * P:3 * P])
    target_proj_2 = jax.lax.stop_gradient(packed[:, 3 * P:4 * P])
    return online_pred_1, online_pred_2, target_proj_1, target_proj_2


# ---------------------------------------------------------------------------
# Parameter init (deterministic, synthetic — no checkpoint loading)
# ---------------------------------------------------------------------------
def _linear_init(key, fan_in, fan_out):
    kw, kb = jax.random.split(key)
    bound = 1.0 / jnp.sqrt(fan_in)
    w = jax.random.uniform(kw, (fan_in, fan_out), jnp.float32, -bound, bound)
    b = jax.random.uniform(kb, (fan_out,), jnp.float32, -bound, bound)
    return w, b


def _mlp_init(key, in_dim, hidden_dim, out_dim):
    k1, k2 = jax.random.split(key)
    w1, b1 = _linear_init(k1, in_dim, hidden_dim)
    gamma = jnp.ones((hidden_dim,), jnp.float32)
    beta = jnp.zeros((hidden_dim,), jnp.float32)
    w2, b2 = _linear_init(k2, hidden_dim, out_dim)
    return (w1, b1, gamma, beta, w2, b2)


def init_byol_params(key, flat_in, in_dim, projection_dim, hidden_dim):
    kb, kp, kq = jax.random.split(key, 3)
    backbone = _linear_init(kb, flat_in, in_dim)
    online_projector = _mlp_init(kp, in_dim, hidden_dim, projection_dim)
    online_predictor = _mlp_init(kq, projection_dim, hidden_dim // 4, projection_dim)
    # target nets are deepcopies of the online ones at init (identical values)
    target_encoder = tuple(jnp.array(p) for p in backbone)
    target_projector = tuple(jnp.array(p) for p in online_projector)
    return dict(backbone=backbone,
                online_projector=online_projector,
                online_predictor=online_predictor,
                target_encoder=target_encoder,
                target_projector=target_projector)


# ---------------------------------------------------------------------------
# Pure-JAX reference (correctness check)
# ---------------------------------------------------------------------------
def _mlp_ref(x, params):
    w1, b1, g, bt, w2, b2 = params
    h = x @ w1 + b1
    m = h.mean(0, keepdims=True)
    v = ((h - m) ** 2).mean(0, keepdims=True)
    h = (h - m) / jnp.sqrt(v + BN_EPS) * g + bt
    h = jnp.maximum(h, 0.0)
    return h @ w2 + b2


def byol_forward_ref(params, x1, x2):
    B = x1.shape[0]
    x1f, x2f = x1.reshape(B, -1), x2.reshape(B, -1)
    wb, bb = params["backbone"]
    wbt, bbt = params["target_encoder"]
    f1 = jnp.maximum(x1f @ wb + bb, 0.0)
    f2 = jnp.maximum(x2f @ wb + bb, 0.0)
    op1 = _mlp_ref(f1, params["online_projector"])
    op2 = _mlp_ref(f2, params["online_projector"])
    pr1 = _mlp_ref(op1, params["online_predictor"])
    pr2 = _mlp_ref(op2, params["online_predictor"])
    t1 = jnp.maximum(x1f @ wbt + bbt, 0.0)
    t2 = jnp.maximum(x2f @ wbt + bbt, 0.0)
    tp1 = _mlp_ref(t1, params["target_projector"])
    tp2 = _mlp_ref(t2, params["target_projector"])
    return pr1, pr2, tp1, tp2


if __name__ == "__main__":
    # small shapes consistent with the module's forward
    B, C, H, W = 8, 3, 16, 16
    in_dim = 64            # synthetic backbone feature dim
    projection_dim = 32
    hidden_dim = 128       # predictor hidden = hidden_dim // 4 = 32

    key = jax.random.PRNGKey(0)
    kx1, kx2, kp = jax.random.split(key, 3)
    x1 = jax.random.normal(kx1, (B, C, H, W), jnp.float32)
    x2 = jax.random.normal(kx2, (B, C, H, W), jnp.float32)

    params = init_byol_params(kp, C * H * W, in_dim, projection_dim, hidden_dim)

    outs = byol_forward(params, x1, x2)
    outs = jax.block_until_ready(outs)

    refs = byol_forward_ref(params, x1, x2)
    for o, r in zip(outs, refs):
        assert o.shape == (B, projection_dim)
        assert jnp.allclose(o, r, atol=5e-4, rtol=5e-4), "mismatch vs reference"

    print("KERNEL_OK")
</pallas_src>

<mosaic_0001>
module attributes {stable_mosaic.version = 11 : i64} {
  func.func @_byol_fused_kernel(%arg0: memref<16x768xf32, #tpu.memory_space<vmem>>, %arg1: memref<768x128xf32, #tpu.memory_space<vmem>>, %arg2: memref<1x128xf32, #tpu.memory_space<vmem>>, %arg3: memref<64x128xf32, #tpu.memory_space<vmem>>, %arg4: memref<1x128xf32, #tpu.memory_space<vmem>>, %arg5: memref<1x128xf32, #tpu.memory_space<vmem>>, %arg6: memref<1x128xf32, #tpu.memory_space<vmem>>, %arg7: memref<128x32xf32, #tpu.memory_space<vmem>>, %arg8: memref<1x32xf32, #tpu.memory_space<vmem>>, %arg9: memref<32x32xf32, #tpu.memory_space<vmem>>, %arg10: memref<1x32xf32, #tpu.memory_space<vmem>>, %arg11: memref<1x32xf32, #tpu.memory_space<vmem>>, %arg12: memref<1x32xf32, #tpu.memory_space<vmem>>, %arg13: memref<32x32xf32, #tpu.memory_space<vmem>>, %arg14: memref<1x32xf32, #tpu.memory_space<vmem>>, %arg15: memref<64x128xf32, #tpu.memory_space<vmem>>, %arg16: memref<1x128xf32, #tpu.memory_space<vmem>>, %arg17: memref<1x128xf32, #tpu.memory_space<vmem>>, %arg18: memref<1x128xf32, #tpu.memory_space<vmem>>, %arg19: memref<128x32xf32, #tpu.memory_space<vmem>>, %arg20: memref<1x32xf32, #tpu.memory_space<vmem>>, %arg21: memref<8x128xf32, #tpu.memory_space<vmem>>) attributes {dimension_semantics = [], scalar_prefetch = 0 : i64, scratch_operands = 0 : i64, tpu.core_type = #tpu.core_type<tc>} {
    %c0 = arith.constant 0 : index
    %c0_0 = arith.constant 0 : index
    %0 = vector.load %arg0[%c0, %c0_0] : memref<16x768xf32, #tpu.memory_space<vmem>>, vector<16x768xf32>
    %c0_1 = arith.constant 0 : index
    %c0_2 = arith.constant 0 : index
    %1 = vector.load %arg1[%c0_1, %c0_2] : memref<768x128xf32, #tpu.memory_space<vmem>>, vector<768x128xf32>
    %cst = arith.constant dense<0.000000e+00> : vector<16x128xf32>
    %2 = tpu.matmul %0, %1, %cst {dimension_numbers = #tpu.dot_dimension_numbers<[1], [0], [0], [1], [0, 0, 1, 1], [], []>} : vector<16x768xf32>, vector<768x128xf32>, vector<16x128xf32> -> vector<16x128xf32>
    %c0_3 = arith.constant 0 : index
    %c0_4 = arith.constant 0 : index
    %3 = vector.load %arg2[%c0_3, %c0_4] : memref<1x128xf32, #tpu.memory_space<vmem>>, vector<1x128xf32>
    %4 = vector.broadcast %3 : vector<1x128xf32> to vector<16x128xf32>
    %5 = arith.addf %2, %4 : vector<16x128xf32>
    %cst_5 = arith.constant 0.000000e+00 : f32
    %6 = vector.broadcast %cst_5 : f32 to vector<16x128xf32>
    %7 = arith.maximumf %5, %6 : vector<16x128xf32>
    %8 = vector.extract_strided_slice %7 {offsets = [0, 0], sizes = [16, 64], strides = [1, 1]} : vector<16x128xf32> to vector<16x64xf32>
    %9 = vector.extract_strided_slice %7 {offsets = [0, 64], sizes = [16, 64], strides = [1, 1]} : vector<16x128xf32> to vector<16x64xf32>
    %c0_6 = arith.constant 0 : index
    %c0_7 = arith.constant 0 : index
    %10 = vector.load %arg3[%c0_6, %c0_7] : memref<64x128xf32, #tpu.memory_space<vmem>>, vector<64x128xf32>
    %c0_8 = arith.constant 0 : index
    %c0_9 = arith.constant 0 : index
    %11 = vector.load %arg4[%c0_8, %c0_9] : memref<1x128xf32, #tpu.memory_space<vmem>>, vector<1x128xf32>
    %c0_10 = arith.constant 0 : index
    %c0_11 = arith.constant 0 : index
    %12 = vector.load %arg5[%c0_10, %c0_11] : memref<1x128xf32, #tpu.memory_space<vmem>>, vector<1x128xf32>
    %c0_12 = arith.constant 0 : index
    %c0_13 = arith.constant 0 : index
    %13 = vector.load %arg6[%c0_12, %c0_13] : memref<1x128xf32, #tpu.memory_space<vmem>>, vector<1x128xf32>
    %c0_14 = arith.constant 0 : index
    %c0_15 = arith.constant 0 : index
    %14 = vector.load %arg7[%c0_14, %c0_15] : memref<128x32xf32, #tpu.memory_space<vmem>>, vector<128x32xf32>
    %c0_16 = arith.constant 0 : index
    %c0_17 = arith.constant 0 : index
    %15 = vector.load %arg8[%c0_16, %c0_17] : memref<1x32xf32, #tpu.memory_space<vmem>>, vector<1x32xf32>
    %cst_18 = arith.constant dense<0.000000e+00> : vector<16x128xf32>
    %16 = tpu.matmul %8, %10, %cst_18 {dimension_numbers = #tpu.dot_dimension_numbers<[1], [0], [0], [1], [0, 0, 1, 1], [], []>} : vector<16x64xf32>, vector<64x128xf32>, vector<16x128xf32> -> vector<16x128xf32>
    %17 = vector.broadcast %11 : vector<1x128xf32> to vector<16x128xf32>
    %18 = arith.addf %16, %17 : vector<16x128xf32>
    %19 = vector.extract_strided_slice %18 {offsets = [0, 0], sizes = [8, 128], strides = [1, 1]} : vector<16x128xf32> to vector<8x128xf32>
    %cst_19 = arith.constant dense<0.000000e+00> : vector<128xf32>
    %20 = vector.multi_reduction <add>, %19, %cst_19 [0] : vector<8x128xf32> to vector<128xf32>
    %21 = vector.shape_cast %20 : vector<128xf32> to vector<1x128xf32>
    %cst_20 = arith.constant 8.000000e+00 : f32
    %22 = vector.broadcast %cst_20 : f32 to vector<1x128xf32>
    %23 = arith.divf %21, %22 : vector<1x128xf32>
    %24 = arith.mulf %19, %19 : vector<8x128xf32>
    %cst_21 = arith.constant dense<0.000000e+00> : vector<128xf32>
    %25 = vector.multi_reduction <add>, %24, %cst_21 [0] : vector<8x128xf32> to vector<128xf32>
    %26 = vector.shape_cast %25 : vector<128xf32> to vector<1x128xf32>
    %cst_22 = arith.constant 8.000000e+00 : f32
    %27 = vector.broadcast %cst_22 : f32 to vector<1x128xf32>
    %28 = arith.divf %26, %27 : vector<1x128xf32>
    %29 = arith.mulf %23, %23 : vector<1x128xf32>
    %30 = arith.subf %28, %29 : vector<1x128xf32>
    %31 = vector.broadcast %23 : vector<1x128xf32> to vector<8x128xf32>
    %32 = arith.subf %19, %31 : vector<8x128xf32>
    %cst_23 = arith.constant 9.99999974E-6 : f32
    %33 = vector.broadcast %cst_23 : f32 to vector<1x128xf32>
    %34 = arith.addf %30, %33 : vector<1x128xf32>
    %35 = math.rsqrt %34 : vector<1x128xf32>
    %36 = vector.broadcast %35 : vector<1x128xf32> to vector<8x128xf32>
    %37 = arith.mulf %32, %36 : vector<8x128xf32>
    %38 = vector.broadcast %12 : vector<1x128xf32> to vector<8x128xf32>
    %39 = arith.mulf %37, %38 : vector<8x128xf32>
    %40 = vector.broadcast %13 : vector<1x128xf32> to vector<8x128xf32>
    %41 = arith.addf %39, %40 : vector<8x128xf32>
    %cst_24 = arith.constant 0.000000e+00 : f32
    %42 = vector.broadcast %cst_24 : f32 to vector<8x128xf32>
    %43 = arith.maximumf %41, %42 : vector<8x128xf32>
    %44 = vector.extract_strided_slice %18 {offsets = [8, 0], sizes = [8, 128], strides = [1, 1]} : vector<16x128xf32> to vector<8x128xf32>
    %cst_25 = arith.constant dense<0.000000e+00> : vector<128xf32>
    %45 = vector.multi_reduction <add>, %44, %cst_25 [0] : vector<8x128xf32> to vector<128xf32>
    %46 = vector.shape_cast %45 : vector<128xf32> to vector<1x128xf32>
    %cst_26 = arith.constant 8.000000e+00 : f32
    %47 = vector.broadcast %cst_26 : f32 to vector<1x128xf32>
    %48 = arith.divf %46, %47 : vector<1x128xf32>
    %49 = arith.mulf %44, %44 : vector<8x128xf32>
    %cst_27 = arith.constant dense<0.000000e+00> : vector<128xf32>
    %50 = vector.multi_reduction <add>, %49, %cst_27 [0] : vector<8x128xf32> to vector<128xf32>
    %51 = vector.shape_cast %50 : vector<128xf32> to vector<1x128xf32>
    %cst_28 = arith.constant 8.000000e+00 : f32
    %52 = vector.broadcast %cst_28 : f32 to vector<1x128xf32>
    %53 = arith.divf %51, %52 : vector<1x128xf32>
    %54 = arith.mulf %48, %48 : vector<1x128xf32>
    %55 = arith.subf %53, %54 : vector<1x128xf32>
    %56 = vector.broadcast %48 : vector<1x128xf32> to vector<8x128xf32>
    %57 = arith.subf %44, %56 : vector<8x128xf32>
    %cst_29 = arith.constant 9.99999974E-6 : f32
    %58 = vector.broadcast %cst_29 : f32 to vector<1x128xf32>
    %59 = arith.addf %55, %58 : vector<1x128xf32>
    %60 = math.rsqrt %59 : vector<1x128xf32>
    %61 = vector.broadcast %60 : vector<1x128xf32> to vector<8x128xf32>
    %62 = arith.mulf %57, %61 : vector<8x128xf32>
    %63 = vector.broadcast %12 : vector<1x128xf32> to vector<8x128xf32>
    %64 = arith.mulf %62, %63 : vector<8x128xf32>
    %65 = vector.broadcast %13 : vector<1x128xf32> to vector<8x128xf32>
    %66 = arith.addf %64, %65 : vector<8x128xf32>
    %cst_30 = arith.constant 0.000000e+00 : f32
    %67 = vector.broadcast %cst_30 : f32 to vector<8x128xf32>
    %68 = arith.maximumf %66, %67 : vector<8x128xf32>
    %69 = tpu.concatenate %43, %68 in 0 : vector<8x128xf32>, vector<8x128xf32> -> vector<16x128xf32>
    %cst_31 = arith.constant dense<0.000000e+00> : vector<16x32xf32>
    %70 = tpu.matmul %69, %14, %cst_31 {dimension_numbers = #tpu.dot_dimension_numbers<[1], [0], [0], [1], [0, 0, 1, 1], [], []>} : vector<16x128xf32>, vector<128x32xf32>, vector<16x32xf32> -> vector<16x32xf32>
    %71 = vector.broadcast %15 : vector<1x32xf32> to vector<16x32xf32>
    %72 = arith.addf %70, %71 : vector<16x32xf32>
    %c0_32 = arith.constant 0 : index
    %c0_33 = arith.constant 0 : index
    %73 = vector.load %arg9[%c0_32, %c0_33] : memref<32x32xf32, #tpu.memory_space<vmem>>, vector<32x32xf32>
    %c0_34 = arith.constant 0 : index
    %c0_35 = arith.constant 0 : index
    %74 = vector.load %arg10[%c0_34, %c0_35] : memref<1x32xf32, #tpu.memory_space<vmem>>, vector<1x32xf32>
    %c0_36 = arith.constant 0 : index
    %c0_37 = arith.constant 0 : index
    %75 = vector.load %arg11[%c0_36, %c0_37] : memref<1x32xf32, #tpu.memory_space<vmem>>, vector<1x32xf32>
    %c0_38 = arith.constant 0 : index
    %c0_39 = arith.constant 0 : index
    %76 = vector.load %arg12[%c0_38, %c0_39] : memref<1x32xf32, #tpu.memory_space<vmem>>, vector<1x32xf32>
    %c0_40 = arith.constant 0 : index
    %c0_41 = arith.constant 0 : index
    %77 = vector.load %arg13[%c0_40, %c0_41] : memref<32x32xf32, #tpu.memory_space<vmem>>, vector<32x32xf32>
    %c0_42 = arith.constant 0 : index
    %c0_43 = arith.constant 0 : index
    %78 = vector.load %arg14[%c0_42, %c0_43] : memref<1x32xf32, #tpu.memory_space<vmem>>, vector<1x32xf32>
    %cst_44 = arith.constant dense<0.000000e+00> : vector<16x32xf32>
    %79 = tpu.matmul %72, %73, %cst_44 {dimension_numbers = #tpu.dot_dimension_numbers<[1], [0], [0], [1], [0, 0, 1, 1], [], []>} : vector<16x32xf32>, vector<32x32xf32>, vector<16x32xf32> -> vector<16x32xf32>
    %80 = vector.broadcast %74 : vector<1x32xf32> to vector<16x32xf32>
    %81 = arith.addf %79, %80 : vector<16x32xf32>
    %82 = vector.extract_strided_slice %81 {offsets = [0, 0], sizes = [8, 32], strides = [1, 1]} : vector<16x32xf32> to vector<8x32xf32>
    %cst_45 = arith.constant dense<0.000000e+00> : vector<32xf32>
    %83 = vector.multi_reduction <add>, %82, %cst_45 [0] : vector<8x32xf32> to vector<32xf32>
    %84 = vector.shape_cast %83 : vector<32xf32> to vector<1x32xf32>
    %cst_46 = arith.constant 8.000000e+00 : f32
    %85 = vector.broadcast %cst_46 : f32 to vector<1x32xf32>
    %86 = arith.divf %84, %85 : vector<1x32xf32>
    %87 = arith.mulf %82, %82 : vector<8x32xf32>
    %cst_47 = arith.constant dense<0.000000e+00> : vector<32xf32>
    %88 = vector.multi_reduction <add>, %87, %cst_47 [0] : vector<8x32xf32> to vector<32xf32>
    %89 = vector.shape_cast %88 : vector<32xf32> to vector<1x32xf32>
    %cst_48 = arith.constant 8.000000e+00 : f32
    %90 = vector.broadcast %cst_48 : f32 to vector<1x32xf32>
    %91 = arith.divf %89, %90 : vector<1x32xf32>
    %92 = arith.mulf %86, %86 : vector<1x32xf32>
    %93 = arith.subf %91, %92 : vector<1x32xf32>
    %94 = vector.broadcast %86 : vector<1x32xf32> to vector<8x32xf32>
    %95 = arith.subf %82, %94 : vector<8x32xf32>
    %cst_49 = arith.constant 9.99999974E-6 : f32
    %96 = vector.broadcast %cst_49 : f32 to vector<1x32xf32>
    %97 = arith.addf %93, %96 : vector<1x32xf32>
    %98 = math.rsqrt %97 : vector<1x32xf32>
    %99 = vector.broadcast %98 : vector<1x32xf32> to vector<8x32xf32>
    %100 = arith.mulf %95, %99 : vector<8x32xf32>
    %101 = vector.broadcast %75 : vector<1x32xf32> to vector<8x32xf32>
    %102 = arith.mulf %100, %101 : vector<8x32xf32>
    %103 = vector.broadcast %76 : vector<1x32xf32> to vector<8x32xf32>
    %104 = arith.addf %102, %103 : vector<8x32xf32>
    %cst_50 = arith.constant 0.000000e+00 : f32
    %105 = vector.broadcast %cst_50 : f32 to vector<8x32xf32>
    %106 = arith.maximumf %104, %105 : vector<8x32xf32>
    %107 = vector.extract_strided_slice %81 {offsets = [8, 0], sizes = [8, 32], strides = [1, 1]} : vector<16x32xf32> to vector<8x32xf32>
    %cst_51 = arith.constant dense<0.000000e+00> : vector<32xf32>
    %108 = vector.multi_reduction <add>, %107, %cst_51 [0] : vector<8x32xf32> to vector<32xf32>
    %109 = vector.shape_cast %108 : vector<32xf32> to vector<1x32xf32>
    %cst_52 = arith.constant 8.000000e+00 : f32
    %110 = vector.broadcast %cst_52 : f32 to vector<1x32xf32>
    %111 = arith.divf %109, %110 : vector<1x32xf32>
    %112 = arith.mulf %107, %107 : vector<8x32xf32>
    %cst_53 = arith.constant dense<0.000000e+00> : vector<32xf32>
    %113 = vector.multi_reduction <add>, %112, %cst_53 [0] : vector<8x32xf32> to vector<32xf32>
    %114 = vector.shape_cast %113 : vector<32xf32> to vector<1x32xf32>
    %cst_54 = arith.constant 8.000000e+00 : f32
    %115 = vector.broadcast %cst_54 : f32 to vector<1x32xf32>
    %116 = arith.divf %114, %115 : vector<1x32xf32>
    %117 = arith.mulf %111, %111 : vector<1x32xf32>
    %118 = arith.subf %116, %117 : vector<1x32xf32>
    %119 = vector.broadcast %111 : vector<1x32xf32> to vector<8x32xf32>
    %120 = arith.subf %107, %119 : vector<8x32xf32>
    %cst_55 = arith.constant 9.99999974E-6 : f32
    %121 = vector.broadcast %cst_55 : f32 to vector<1x32xf32>
    %122 = arith.addf %118, %121 : vector<1x32xf32>
    %123 = math.rsqrt %122 : vector<1x32xf32>
    %124 = vector.broadcast %123 : vector<1x32xf32> to vector<8x32xf32>
    %125 = arith.mulf %120, %124 : vector<8x32xf32>
    %126 = vector.broadcast %75 : vector<1x32xf32> to vector<8x32xf32>
    %127 = arith.mulf %125, %126 : vector<8x32xf32>
    %128 = vector.broadcast %76 : vector<1x32xf32> to vector<8x32xf32>
    %129 = arith.addf %127, %128 : vector<8x32xf32>
    %cst_56 = arith.constant 0.000000e+00 : f32
    %130 = vector.broadcast %cst_56 : f32 to vector<8x32xf32>
    %131 = arith.maximumf %129, %130 : vector<8x32xf32>
    %132 = tpu.concatenate %106, %131 in 0 : vector<8x32xf32>, vector<8x32xf32> -> vector<16x32xf32>
    %cst_57 = arith.constant dense<0.000000e+00> : vector<16x32xf32>
    %133 = tpu.matmul %132, %77, %cst_57 {dimension_numbers = #tpu.dot_dimension_numbers<[1], [0], [0], [1], [0, 0, 1, 1], [], []>} : vector<16x32xf32>, vector<32x32xf32>, vector<16x32xf32> -> vector<16x32xf32>
    %134 = vector.broadcast %78 : vector<1x32xf32> to vector<16x32xf32>
    %135 = arith.addf %133, %134 : vector<16x32xf32>
    %c0_58 = arith.constant 0 : index
    %c0_59 = arith.constant 0 : index
    %136 = vector.load %arg15[%c0_58, %c0_59] : memref<64x128xf32, #tpu.memory_space<vmem>>, vector<64x128xf32>
    %c0_60 = arith.constant 0 : index
    %c0_61 = arith.constant 0 : index
    %137 = vector.load %arg16[%c0_60, %c0_61] : memref<1x128xf32, #tpu.memory_space<vmem>>, vector<1x128xf32>
    %c0_62 = arith.constant 0 : index
    %c0_63 = arith.constant 0 : index
    %138 = vector.load %arg17[%c0_62, %c0_63] : memref<1x128xf32, #tpu.memory_space<vmem>>, vector<1x128xf32>
    %c0_64 = arith.constant 0 : index
    %c0_65 = arith.constant 0 : index
    %139 = vector.load %arg18[%c0_64, %c0_65] : memref<1x128xf32, #tpu.memory_space<vmem>>, vector<1x128xf32>
    %c0_66 = arith.constant 0 : index
    %c0_67 = arith.constant 0 : index
    %140 = vector.load %arg19[%c0_66, %c0_67] : memref<128x32xf32, #tpu.memory_space<vmem>>, vector<128x32xf32>
    %c0_68 = arith.constant 0 : index
    %c0_69 = arith.constant 0 : index
    %141 = vector.load %arg20[%c0_68, %c0_69] : memref<1x32xf32, #tpu.memory_space<vmem>>, vector<1x32xf32>
    %cst_70 = arith.constant dense<0.000000e+00> : vector<16x128xf32>
    %142 = tpu.matmul %9, %136, %cst_70 {dimension_numbers = #tpu.dot_dimension_numbers<[1], [0], [0], [1], [0, 0, 1, 1], [], []>} : vector<16x64xf32>, vector<64x128xf32>, vector<16x128xf32> -> vector<16x128xf32>
    %143 = vector.broadcast %137 : vector<1x128xf32> to vector<16x128xf32>
    %144 = arith.addf %142, %143 : vector<16x128xf32>
    %145 = vector.extract_strided_slice %144 {offsets = [0, 0], sizes = [8, 128], strides = [1, 1]} : vector<16x128xf32> to vector<8x128xf32>
    %cst_71 = arith.constant dense<0.000000e+00> : vector<128xf32>
    %146 = vector.multi_reduction <add>, %145, %cst_71 [0] : vector<8x128xf32> to vector<128xf32>
    %147 = vector.shape_cast %146 : vector<128xf32> to vector<1x128xf32>
    %cst_72 = arith.constant 8.000000e+00 : f32
    %148 = vector.broadcast %cst_72 : f32 to vector<1x128xf32>
    %149 = arith.divf %147, %148 : vector<1x128xf32>
    %150 = arith.mulf %145, %145 : vector<8x128xf32>
    %cst_73 = arith.constant dense<0.000000e+00> : vector<128xf32>
    %151 = vector.multi_reduction <add>, %150, %cst_73 [0] : vector<8x128xf32> to vector<128xf32>
    %152 = vector.shape_cast %151 : vector<128xf32> to vector<1x128xf32>
    %cst_74 = arith.constant 8.000000e+00 : f32
    %153 = vector.broadcast %cst_74 : f32 to vector<1x128xf32>
    %154 = arith.divf %152, %153 : vector<1x128xf32>
    %155 = arith.mulf %149, %149 : vector<1x128xf32>
    %156 = arith.subf %154, %155 : vector<1x128xf32>
    %157 = vector.broadcast %149 : vector<1x128xf32> to vector<8x128xf32>
    %158 = arith.subf %145, %157 : vector<8x128xf32>
    %cst_75 = arith.constant 9.99999974E-6 : f32
    %159 = vector.broadcast %cst_75 : f32 to vector<1x128xf32>
    %160 = arith.addf %156, %159 : vector<1x128xf32>
    %161 = math.rsqrt %160 : vector<1x128xf32>
    %162 = vector.broadcast %161 : vector<1x128xf32> to vector<8x128xf32>
    %163 = arith.mulf %158, %162 : vector<8x128xf32>
    %164 = vector.broadcast %138 : vector<1x128xf32> to vector<8x128xf32>
    %165 = arith.mulf %163, %164 : vector<8x128xf32>
    %166 = vector.broadcast %139 : vector<1x128xf32> to vector<8x128xf32>
    %167 = arith.addf %165, %166 : vector<8x128xf32>
    %cst_76 = arith.constant 0.000000e+00 : f32
    %168 = vector.broadcast %cst_76 : f32 to vector<8x128xf32>
    %169 = arith.maximumf %167, %168 : vector<8x128xf32>
    %170 = vector.extract_strided_slice %144 {offsets = [8, 0], sizes = [8, 128], strides = [1, 1]} : vector<16x128xf32> to vector<8x128xf32>
    %cst_77 = arith.constant dense<0.000000e+00> : vector<128xf32>
    %171 = vector.multi_reduction <add>, %170, %cst_77 [0] : vector<8x128xf32> to vector<128xf32>
    %172 = vector.shape_cast %171 : vector<128xf32> to vector<1x128xf32>
    %cst_78 = arith.constant 8.000000e+00 : f32
    %173 = vector.broadcast %cst_78 : f32 to vector<1x128xf32>
    %174 = arith.divf %172, %173 : vector<1x128xf32>
    %175 = arith.mulf %170, %170 : vector<8x128xf32>
    %cst_79 = arith.constant dense<0.000000e+00> : vector<128xf32>
    %176 = vector.multi_reduction <add>, %175, %cst_79 [0] : vector<8x128xf32> to vector<128xf32>
    %177 = vector.shape_cast %176 : vector<128xf32> to vector<1x128xf32>
    %cst_80 = arith.constant 8.000000e+00 : f32
    %178 = vector.broadcast %cst_80 : f32 to vector<1x128xf32>
    %179 = arith.divf %177, %178 : vector<1x128xf32>
    %180 = arith.mulf %174, %174 : vector<1x128xf32>
    %181 = arith.subf %179, %180 : vector<1x128xf32>
    %182 = vector.broadcast %174 : vector<1x128xf32> to vector<8x128xf32>
    %183 = arith.subf %170, %182 : vector<8x128xf32>
    %cst_81 = arith.constant 9.99999974E-6 : f32
    %184 = vector.broadcast %cst_81 : f32 to vector<1x128xf32>
    %185 = arith.addf %181, %184 : vector<1x128xf32>
    %186 = math.rsqrt %185 : vector<1x128xf32>
    %187 = vector.broadcast %186 : vector<1x128xf32> to vector<8x128xf32>
    %188 = arith.mulf %183, %187 : vector<8x128xf32>
    %189 = vector.broadcast %138 : vector<1x128xf32> to vector<8x128xf32>
    %190 = arith.mulf %188, %189 : vector<8x128xf32>
    %191 = vector.broadcast %139 : vector<1x128xf32> to vector<8x128xf32>
    %192 = arith.addf %190, %191 : vector<8x128xf32>
    %cst_82 = arith.constant 0.000000e+00 : f32
    %193 = vector.broadcast %cst_82 : f32 to vector<8x128xf32>
    %194 = arith.maximumf %192, %193 : vector<8x128xf32>
    %195 = tpu.concatenate %169, %194 in 0 : vector<8x128xf32>, vector<8x128xf32> -> vector<16x128xf32>
    %cst_83 = arith.constant dense<0.000000e+00> : vector<16x32xf32>
    %196 = tpu.matmul %195, %140, %cst_83 {dimension_numbers = #tpu.dot_dimension_numbers<[1], [0], [0], [1], [0, 0, 1, 1], [], []>} : vector<16x128xf32>, vector<128x32xf32>, vector<16x32xf32> -> vector<16x32xf32>
    %197 = vector.broadcast %141 : vector<1x32xf32> to vector<16x32xf32>
    %198 = arith.addf %196, %197 : vector<16x32xf32>
    %199 = vector.extract_strided_slice %135 {offsets = [0, 0], sizes = [8, 32], strides = [1, 1]} : vector<16x32xf32> to vector<8x32xf32>
    %200 = vector.extract_strided_slice %135 {offsets = [8, 0], sizes = [8, 32], strides = [1, 1]} : vector<16x32xf32> to vector<8x32xf32>
    %201 = vector.extract_strided_slice %198 {offsets = [0, 0], sizes = [8, 32], strides = [1, 1]} : vector<16x32xf32> to vector<8x32xf32>
    %202 = vector.extract_strided_slice %198 {offsets = [8, 0], sizes = [8, 32], strides = [1, 1]} : vector<16x32xf32> to vector<8x32xf32>
    %203 = tpu.concatenate %199, %200, %201, %202 in 1 : vector<8x32xf32>, vector<8x32xf32>, vector<8x32xf32>, vector<8x32xf32> -> vector<8x128xf32>
    %c0_84 = arith.constant 0 : index
    %c0_85 = arith.constant 0 : index
    %204 = vector.load %arg21[%c0_84, %c0_85] : memref<8x128xf32, #tpu.memory_space<vmem>>, vector<8x128xf32>
    tpu.vector_store %arg21[%c0_84, %c0_85], %203 {strides = array<i32>} : memref<8x128xf32, #tpu.memory_space<vmem>>, vector<8x128xf32>,
    return
  }
}

</mosaic_0001>

<llo_original>
// kernel: tpu_custom_call.1
$region0: #{tpu_custom_call.1}
  #allocation0 [shape = 'u32[]', space=smem, size = 0x4, offset = 0x4, fixed_abs, tag = 'smem constant byte address 0x4 - core index']
  #allocation1 [shape = 'u32[144,128]{1,0:T(1,128)}', space=vmem, size = 0x12000, scoped, tag = 'internal scratch']
  %s0 = inlined_call_operand.vmem [shape: f32[16,768], index: 0, kind: input, shape index: {}]
  %s1 = inlined_call_operand.hbm [shape: f32[768,128], index: 1, kind: input, shape index: {}]
  %s2 = inlined_call_operand.vmem [shape: f32[1,128], index: 2, kind: input, shape index: {}]
  %s3 = inlined_call_operand.vmem [shape: f32[64,128], index: 3, kind: input, shape index: {}]
  %s4 = inlined_call_operand.vmem [shape: f32[1,128], index: 4, kind: input, shape index: {}]
  %s5 = inlined_call_operand.vmem [shape: f32[1,128], index: 5, kind: input, shape index: {}]
  %s6 = inlined_call_operand.vmem [shape: f32[1,128], index: 6, kind: input, shape index: {}]
  %s7 = inlined_call_operand.vmem [shape: f32[128,32], index: 7, kind: input, shape index: {}]
  %s8 = inlined_call_operand.vmem [shape: f32[1,32], index: 8, kind: input, shape index: {}]
  %s9 = inlined_call_operand.vmem [shape: f32[32,32], index: 9, kind: input, shape index: {}]
  %s10 = inlined_call_operand.vmem [shape: f32[1,32], index: 10, kind: input, shape index: {}]
  %s11 = inlined_call_operand.vmem [shape: f32[1,32], index: 11, kind: input, shape index: {}]
  %s12 = inlined_call_operand.vmem [shape: f32[1,32], index: 12, kind: input, shape index: {}]
  %s13 = inlined_call_operand.vmem [shape: f32[32,32], index: 13, kind: input, shape index: {}]
  %s14 = inlined_call_operand.vmem [shape: f32[1,32], index: 14, kind: input, shape index: {}]
  %s15 = inlined_call_operand.vmem [shape: f32[64,128], index: 15, kind: input, shape index: {}]
  %s16 = inlined_call_operand.vmem [shape: f32[1,128], index: 16, kind: input, shape index: {}]
  %s17 = inlined_call_operand.vmem [shape: f32[1,128], index: 17, kind: input, shape index: {}]
  %s18 = inlined_call_operand.vmem [shape: f32[1,128], index: 18, kind: input, shape index: {}]
  %s19 = inlined_call_operand.vmem [shape: f32[128,32], index: 19, kind: input, shape index: {}]
  %s20 = inlined_call_operand.vmem [shape: f32[1,32], index: 20, kind: input, shape index: {}]
  %s21 = inlined_call_operand.hbm [shape: f32[8,128], index: 21, kind: output, shape index: {}]
  %s22 = sld [smem:[#allocation0]]
  $region98: #{tpu_custom_call.1} parent=0
    _
  %s24 = ssub.s32 1, %s22
  %s25 = scalar_select 0, %s24, %s22
  $region1: #{tpu_custom_call.1} parent=0
    #allocation2 [shape = 'u8[393216]{0}', space=vmem, size = 0x60000, scoped, tag = 'input window, operand 1, single buffered']
    #allocation3 [shape = 's32[1]{0}', space=sflag, size = 0x4, scoped, tag = 'scoped memory for tpu_custom_call.1']
    #allocation4 [shape = 's32[1]{0}', space=sflag, size = 0x4, scoped, tag = 'scoped memory for tpu_custom_call.1']
    #allocation5 [shape = 'u8[4096]{0}', space=vmem, size = 0x1000, scoped, tag = 'output window, operand 0, single buffered']
    %26 = vsyncpa [#allocation3], 0
    %27 = vsyncpa [#allocation4], 0
    // Predicated region
    $region2: #{tpu_custom_call.1} parent=1 // pred_check
      _
    $region3: #{tpu_custom_call.1} parent=1 // pred_check_branch
      %29 = sbr.rel (0) target = $region5
    $region4: #{tpu_custom_call.1} parent=1 // pred_region
      _
    $region5: #{tpu_custom_call.1} parent=1 // pred_fallthru
      _
    // Predicated region
    $region6: #{tpu_custom_call.1} parent=1 // pred_check
      _
    $region7: #{tpu_custom_call.1} parent=1 // pred_check_branch
      %31 = sbr.rel (0) target = $region9
    $region8: #{tpu_custom_call.1} parent=1 // pred_region
      %s33 = ssub.s32 12288, 12288
      %34 = vsyncadd [#allocation3], %s33
      %s35 = sshll.u32 [#allocation2], 4
      %s36 = int_to_ptr.vmem [resolvable:$true] %s35
      %41 = dma.hbm_to_vmem [thread:$0]  %s1, 12288, %s36, [#allocation3], 128, 128, 8
    $region9: #{tpu_custom_call.1} parent=1 // pred_fallthru
      _
    // Predicated region
    $region10: #{tpu_custom_call.1} parent=1 // pred_check
      _
    $region11: #{tpu_custom_call.1} parent=1 // pred_check_branch
      %43 = sbr.rel (0) target = $region13
    $region12: #{tpu_custom_call.1} parent=1 // pred_region
      _
    $region13: #{tpu_custom_call.1} parent=1 // pred_fallthru
      _
    // Predicated region
    $region14: #{tpu_custom_call.1} parent=1 // pred_check
      _
    $region15: #{tpu_custom_call.1} parent=1 // pred_check_branch
      %45 = sbr.rel (0) target = $region17
    $region16: #{tpu_custom_call.1} parent=1 // pred_region
      _
    $region17: #{tpu_custom_call.1} parent=1 // pred_fallthru
      _
    // Predicated region
    $region18: #{tpu_custom_call.1} parent=1 // pred_check
      _
    $region19: #{tpu_custom_call.1} parent=1 // pred_check_branch
      %47 = sbr.rel (0) target = $region21
    $region20: #{tpu_custom_call.1} parent=1 // pred_region
      _
    $region21: #{tpu_custom_call.1} parent=1 // pred_fallthru
      _
    // Predicated region
    $region22: #{tpu_custom_call.1} parent=1 // pred_check
      _
    $region23: #{tpu_custom_call.1} parent=1 // pred_check_branch
      %49 = sbr.rel (0) target = $region25
    $region24: #{tpu_custom_call.1} parent=1 // pred_region
      _
    $region25: #{tpu_custom_call.1} parent=1 // pred_fallthru
      _
    // Predicated region
    $region26: #{tpu_custom_call.1} parent=1 // pred_check
      _
    $region27: #{tpu_custom_call.1} parent=1 // pred_check_branch
      %51 = sbr.rel (0) target = $region29
    $region28: #{tpu_custom_call.1} parent=1 // pred_region
      _
    $region29: #{tpu_custom_call.1} parent=1 // pred_fallthru
      _
    // Predicated region
    $region30: #{tpu_custom_call.1} parent=1 // pred_check
      _
    $region31: #{tpu_custom_call.1} parent=1 // pred_check_branch
      %53 = sbr.rel (0) target = $region33
    $region32: #{tpu_custom_call.1} parent=1 // pred_region
      _
    $region33: #{tpu_custom_call.1} parent=1 // pred_fallthru
      _
    // Predicated region
    $region34: #{tpu_custom_call.1} parent=1 // pred_check
      _
    $region35: #{tpu_custom_call.1} parent=1 // pred_check_branch
      %55 = sbr.rel (0) target = $region37
    $region36: #{tpu_custom_call.1} parent=1 // pred_region
      _
    $region37: #{tpu_custom_call.1} parent=1 // pred_fallthru
      _
    // Predicated region
    $region38: #{tpu_custom_call.1} parent=1 // pred_check
      _
    $region39: #{tpu_custom_call.1} parent=1 // pred_check_branch
      %57 = sbr.rel (0) target = $region41
    $region40: #{tpu_custom_call.1} parent=1 // pred_region
      _
    $region41: #{tpu_custom_call.1} parent=1 // pred_fallthru
      _
    // Predicated region
    $region42: #{tpu_custom_call.1} parent=1 // pred_check
      _
    $region43: #{tpu_custom_call.1} parent=1 // pred_check_branch
      %59 = sbr.rel (0) target = $region45
    $region44: #{tpu_custom_call.1} parent=1 // pred_region
      _
    $region45: #{tpu_custom_call.1} parent=1 // pred_fallthru
      _
    // Predicated region
    $region46: #{tpu_custom_call.1} parent=1 // pred_check
      _
    $region47: #{tpu_custom_call.1} parent=1 // pred_check_branch
      %61 = sbr.rel (0) target = $region49
    $region48: #{tpu_custom_call.1} parent=1 // pred_region
      _
    $region49: #{tpu_custom_call.1} parent=1 // pred_fallthru
      _
    // Predicated region
    $region50: #{tpu_custom_call.1} parent=1 // pred_check
      _
    $region51: #{tpu_custom_call.1} parent=1 // pred_check_branch
      %63 = sbr.rel (0) target = $region53
    $region52: #{tpu_custom_call.1} parent=1 // pred_region
      _
    $region53: #{tpu_custom_call.1} parent=1 // pred_fallthru
      _
    // Predicated region
    $region54: #{tpu_custom_call.1} parent=1 // pred_check
      _
    $region55: #{tpu_custom_call.1} parent=1 // pred_check_branch
      %65 = sbr.rel (0) target = $region57
    $region56: #{tpu_custom_call.1} parent=1 // pred_region
      _
    $region57: #{tpu_custom_call.1} parent=1 // pred_fallthru
      _
    // Predicated region
    $region58: #{tpu_custom_call.1} parent=1 // pred_check
      _
    $region59: #{tpu_custom_call.1} parent=1 // pred_check_branch
      %67 = sbr.rel (0) target = $region61
    $region60: #{tpu_custom_call.1} parent=1 // pred_region
      _
    $region61: #{tpu_custom_call.1} parent=1 // pred_fallthru
      _
    // Predicated region
    $region62: #{tpu_custom_call.1} parent=1 // pred_check
      _
    $region63: #{tpu_custom_call.1} parent=1 // pred_check_branch
      %69 = sbr.rel (0) target = $region65
    $region64: #{tpu_custom_call.1} parent=1 // pred_region
      _
    $region65: #{tpu_custom_call.1} parent=1 // pred_fallthru
      _
    // Predicated region
    $region66: #{tpu_custom_call.1} parent=1 // pred_check
      _
    $region67: #{tpu_custom_call.1} parent=1 // pred_check_branch
      %71 = sbr.rel (0) target = $region69
    $region68: #{tpu_custom_call.1} parent=1 // pred_region
      _
    $region69: #{tpu_custom_call.1} parent=1 // pred_fallthru
      _
    // Predicated region
    $region70: #{tpu_custom_call.1} parent=1 // pred_check
      _
    $region71: #{tpu_custom_call.1} parent=1 // pred_check_branch
      %73 = sbr.rel (0) target = $region73
    $region72: #{tpu_custom_call.1} parent=1 // pred_region
      _
    $region73: #{tpu_custom_call.1} parent=1 // pred_fallthru
      _
    // Predicated region
    $region74: #{tpu_custom_call.1} parent=1 // pred_check
      _
    $region75: #{tpu_custom_call.1} parent=1 // pred_check_branch
      %75 = sbr.rel (0) target = $region77
    $region76: #{tpu_custom_call.1} parent=1 // pred_region
      _
    $region77: #{tpu_custom_call.1} parent=1 // pred_fallthru
      _
    // Predicated region
    $region78: #{tpu_custom_call.1} parent=1 // pred_check
      _
    $region79: #{tpu_custom_call.1} parent=1 // pred_check_branch
      %77 = sbr.rel (0) target = $region81
    $region80: #{tpu_custom_call.1} parent=1 // pred_region
      _
    $region81: #{tpu_custom_call.1} parent=1 // pred_fallthru
      _
    // Predicated region
    $region82: #{tpu_custom_call.1} parent=1 // pred_check
      _
    $region83: #{tpu_custom_call.1} parent=1 // pred_check_branch
      %79 = sbr.rel (0) target = $region85
    $region84: #{tpu_custom_call.1} parent=1 // pred_region
      _
    $region85: #{tpu_custom_call.1} parent=1 // pred_fallthru
      _
    // Predicated region
    $region86: #{tpu_custom_call.1} parent=1 // pred_check
      _
    $region87: #{tpu_custom_call.1} parent=1 // pred_check_branch
      %81 = sbr.rel (0) target = $region89
    $region88: #{tpu_custom_call.1} parent=1 // pred_region
      %82 = dma.done [#allocation3], 12288
    $region89: #{tpu_custom_call.1} parent=1 // pred_fallthru
      _
    %v83 = vld [vmem:[%s0] sm:$0xff]
    %v84 = vld [vmem:[%s0 + $0x8] sm:$0xff]
    %v85 = vld [vmem:[%s0 + $0x10] sm:$0xff]
    %v86 = vld [vmem:[%s0 + $0x18] sm:$0xff]
    %v87 = vld [vmem:[%s0 + $0x20] sm:$0xff]
    %v88 = vld [vmem:[%s0 + $0x28] sm:$0xff]
    %v89 = vld [vmem:[%s0 + $0x30] sm:$0xff]
    %v90 = vld [vmem:[%s0 + $0x38] sm:$0xff]
    %v91 = vld [vmem:[%s0 + $0x40] sm:$0xff]
    %v92 = vld [vmem:[%s0 + $0x48] sm:$0xff]
    %v93 = vld [vmem:[%s0 + $0x50] sm:$0xff]
    %v94 = vld [vmem:[%s0 + $0x58] sm:$0xff]
    %v95 = vld [vmem:[#allocation2] sm:$0xff]
    %v96 = vld [vmem:[#allocation2 + $0x8] sm:$0xff]
    %v97 = vld [vmem:[#allocation2 + $0x10] sm:$0xff]
    %v98 = vld [vmem:[#allocation2 + $0x18] sm:$0xff]
    %v99 = vld [vmem:[#allocation2 + $0x20] sm:$0xff]
    %v100 = vld [vmem:[#allocation2 + $0x28] sm:$0xff]
    %v101 = vld [vmem:[#allocation2 + $0x30] sm:$0xff]
    %v102 = vld [vmem:[#allocation2 + $0x38] sm:$0xff]
    %v103 = vld [vmem:[#allocation2 + $0x40] sm:$0xff]
    %v104 = vld [vmem:[#allocation2 + $0x48] sm:$0xff]
    %v105 = vld [vmem:[#allocation2 + $0x50] sm:$0xff]
    %v106 = vld [vmem:[#allocation2 + $0x58] sm:$0xff]
    %v107 = vld [vmem:[#allocation2 + $0x60] sm:$0xff]
    %v108 = vld [vmem:[#allocation2 + $0x68] sm:$0xff]
    %v109 = vld [vmem:[#allocation2 + $0x70] sm:$0xff]
    %v110 = vld [vmem:[#allocation2 + $0x78] sm:$0xff]
    %v111 = vld [vmem:[#allocation2 + $0x80] sm:$0xff]
    %v112 = vld [vmem:[#allocation2 + $0x88] sm:$0xff]
    %v113 = vld [vmem:[#allocation2 + $0x90] sm:$0xff]
    %v114 = vld [vmem:[#allocation2 + $0x98] sm:$0xff]
    %v115 = vld [vmem:[#allocation2 + $0xa0] sm:$0xff]
    %v116 = vld [vmem:[#allocation2 + $0xa8] sm:$0xff]
    %v117 = vld [vmem:[#allocation2 + $0xb0] sm:$0xff]
    %v118 = vld [vmem:[#allocation2 + $0xb8] sm:$0xff]
    %v119 = vld [vmem:[#allocation2 + $0xc0] sm:$0xff]
    %v120 = vld [vmem:[#allocation2 + $0xc8] sm:$0xff]
    %v121 = vld [vmem:[#allocation2 + $0xd0] sm:$0xff]
    %v122 = vld [vmem:[#allocation2 + $0xd8] sm:$0xff]
    %v123 = vld [vmem:[#allocation2 + $0xe0] sm:$0xff]
    %v124 = vld [vmem:[#allocation2 + $0xe8] sm:$0xff]
    %v125 = vld [vmem:[#allocation2 + $0xf0] sm:$0xff]
    %v126 = vld [vmem:[#allocation2 + $0xf8] sm:$0xff]
    %v127 = vld [vmem:[#allocation2 + $0x100] sm:$0xff]
    %v128 = vld [vmem:[#allocation2 + $0x108] sm:$0xff]
    %v129 = vld [vmem:[#allocation2 + $0x110] sm:$0xff]
    %v130 = vld [vmem:[#allocation2 + $0x118] sm:$0xff]
    %v131 = vld [vmem:[#allocation2 + $0x120] sm:$0xff]
    %v132 = vld [vmem:[#allocation2 + $0x128] sm:$0xff]
    %v133 = vld [vmem:[#allocation2 + $0x130] sm:$0xff]
    %v134 = vld [vmem:[#allocation2 + $0x138] sm:$0xff]
    %v135 = vld [vmem:[#allocation2 + $0x140] sm:$0xff]
    %v136 = vld [vmem:[#allocation2 + $0x148] sm:$0xff]
    %v137 = vld [vmem:[#allocation2 + $0x150] sm:$0xff]
    %v138 = vld [vmem:[#allocation2 + $0x158] sm:$0xff]
    %v139 = vld [vmem:[#allocation2 + $0x160] sm:$0xff]
    %v140 = vld [vmem:[#allocation2 + $0x168] sm:$0xff]
    %v141 = vld [vmem:[#allocation2 + $0x170] sm:$0xff]
    %v142 = vld [vmem:[#allocation2 + $0x178] sm:$0xff]
    %v143 = vld [vmem:[#allocation2 + $0x180] sm:$0xff]
    %v144 = vld [vmem:[#allocation2 + $0x188] sm:$0xff]
    %v145 = vld [vmem:[#allocation2 + $0x190] sm:$0xff]
    %v146 = vld [vmem:[#allocation2 + $0x198] sm:$0xff]
    %v147 = vld [vmem:[#allocation2 + $0x1a0] sm:$0xff]
    %v148 = vld [vmem:[#allocation2 + $0x1a8] sm:$0xff]
    %v149 = vld [vmem:[#allocation2 + $0x1b0] sm:$0xff]
    %v150 = vld [vmem:[#allocation2 + $0x1b8] sm:$0xff]
    %v151 = vld [vmem:[#allocation2 + $0x1c0] sm:$0xff]
    %v152 = vld [vmem:[#allocation2 + $0x1c8] sm:$0xff]
    %v153 = vld [vmem:[#allocation2 + $0x1d0] sm:$0xff]
    %v154 = vld [vmem:[#allocation2 + $0x1d8] sm:$0xff]
    %v155 = vld [vmem:[#allocation2 + $0x1e0] sm:$0xff]
    %v156 = vld [vmem:[#allocation2 + $0x1e8] sm:$0xff]
    %v157 = vld [vmem:[#allocation2 + $0x1f0] sm:$0xff]
    %v158 = vld [vmem:[#allocation2 + $0x1f8] sm:$0xff]
    %v159 = vld [vmem:[#allocation2 + $0x200] sm:$0xff]
    %v160 = vld [vmem:[#allocation2 + $0x208] sm:$0xff]
    %v161 = vld [vmem:[#allocation2 + $0x210] sm:$0xff]
    %v162 = vld [vmem:[#allocation2 + $0x218] sm:$0xff]
    %v163 = vld [vmem:[#allocation2 + $0x220] sm:$0xff]
    %v164 = vld [vmem:[#allocation2 + $0x228] sm:$0xff]
    %v165 = vld [vmem:[#allocation2 + $0x230] sm:$0xff]
    %v166 = vld [vmem:[#allocation2 + $0x238] sm:$0xff]
    %v167 = vld [vmem:[#allocation2 + $0x240] sm:$0xff]
    %v168 = vld [vmem:[#allocation2 + $0x248] sm:$0xff]
    %v169 = vld [vmem:[#allocation2 + $0x250] sm:$0xff]
    %v170 = vld [vmem:[#allocation2 + $0x258] sm:$0xff]
    %v171 = vld [vmem:[#allocation2 + $0x260] sm:$0xff]
    %v172 = vld [vmem:[#allocation2 + $0x268] sm:$0xff]
    %v173 = vld [vmem:[#allocation2 + $0x270] sm:$0xff]
    %v174 = vld [vmem:[#allocation2 + $0x278] sm:$0xff]
    %v175 = vld [vmem:[#allocation2 + $0x280] sm:$0xff]
    %v176 = vld [vmem:[#allocation2 + $0x288] sm:$0xff]
    %v177 = vld [vmem:[#allocation2 + $0x290] sm:$0xff]
    %v178 = vld [vmem:[#allocation2 + $0x298] sm:$0xff]
    %v179 = vld [vmem:[#allocation2 + $0x2a0] sm:$0xff]
    %v180 = vld [vmem:[#allocation2 + $0x2a8] sm:$0xff]
    %v181 = vld [vmem:[#allocation2 + $0x2b0] sm:$0xff]
    %v182 = vld [vmem:[#allocation2 + $0x2b8] sm:$0xff]
    %v183 = vld [vmem:[#allocation2 + $0x2c0] sm:$0xff]
    %v184 = vld [vmem:[#allocation2 + $0x2c8] sm:$0xff]
    %v185 = vld [vmem:[#allocation2 + $0x2d0] sm:$0xff]
    %v186 = vld [vmem:[#allocation2 + $0x2d8] sm:$0xff]
    %v187 = vld [vmem:[#allocation2 + $0x2e0] sm:$0xff]
    %v188 = vld [vmem:[#allocation2 + $0x2e8] sm:$0xff]
    %v189 = vld [vmem:[#allocation2 + $0x2f0] sm:$0xff]
    %v190 = vld [vmem:[#allocation2 + $0x2f8] sm:$0xff]
    %v191 = vld [vmem:[%s2] sm:$0x1]
    %v193 = vlaneseq
    %v194 = vshrl.u32 %v193, 7
    %v195 = vsub.s32 0, %v194
    %v196 = vrot.slane %v191, %v195
    %198 = vmatprep.subr.mxu0 0.0
    %199 = vmatpush1.msra.mxu0 %v95
    %200 = vmatprep.subr.mxu0 0.0
    %201 = vmatpush1.msra.mxu0 %v96
    %202 = vmatprep.subr.mxu0 0.0
    %203 = vmatpush1.msra.mxu0 %v97
    %204 = vmatprep.subr.mxu0 0.0
    %205 = vmatpush1.msra.mxu0 %v98
    %206 = vmatprep.subr.mxu0 0.0
    %207 = vmatpush1.msra.mxu0 %v99
    %208 = vmatprep.subr.mxu0 0.0
    %209 = vmatpush1.msra.mxu0 %v100
    %210 = vmatprep.subr.mxu0 0.0
    %211 = vmatpush1.msra.mxu0 %v101
    %212 = vmatprep.subr.mxu0 0.0
    %213 = vmatpush1.msra.mxu0 %v102
    %214 = vmatprep.subr.mxu0 0.0
    %215 = vmatpush1.msra.mxu0 %v103
    %216 = vmatprep.subr.mxu0 0.0
    %217 = vmatpush1.msra.mxu0 %v104
    %218 = vmatprep.subr.mxu0 0.0
    %219 = vmatpush1.msra.mxu0 %v105
    %220 = vmatprep.subr.mxu0 0.0
    %221 = vmatpush1.msra.mxu0 %v106
    %222 = vmatprep.subr.mxu0 0.0
    %223 = vmatpush1.msra.mxu0 %v107
    %224 = vmatprep.subr.mxu0 0.0
    %225 = vmatpush1.msra.mxu0 %v108
    %226 = vmatprep.subr.mxu0 0.0
    %227 = vmatpush1.msra.mxu0 %v109
    %228 = vmatprep.subr.mxu0 0.0
    %229 = vmatpush1.msra.mxu0 %v110
    %230 = vmatprep.subr.mxu0 0.0
    %231 = vmatpush1.msra.mxu0 %v111
    %232 = vmatprep.subr.mxu0 0.0
    %233 = vmatpush1.msra.mxu0 %v112
    %234 = vmatprep.subr.mxu0 0.0
    %235 = vmatpush1.msra.mxu0 %v113
    %236 = vmatprep.subr.mxu0 0.0
    %237 = vmatpush1.msra.mxu0 %v114
    %238 = vmatprep.subr.mxu0 0.0
    %239 = vmatpush1.msra.mxu0 %v115
    %240 = vmatprep.subr.mxu0 0.0
    %241 = vmatpush1.msra.mxu0 %v116
    %242 = vmatprep.subr.mxu0 0.0
    %243 = vmatpush1.msra.mxu0 %v117
    %244 = vmatprep.subr.mxu0 0.0
    %245 = vmatpush1.msra.mxu0 %v118
    %246 = vmatprep.subr.mxu0 0.0
    %247 = vmatpush1.msra.mxu0 %v119
    %248 = vmatprep.subr.mxu0 0.0
    %249 = vmatpush1.msra.mxu0 %v120
    %250 = vmatprep.subr.mxu0 0.0
    %251 = vmatpush1.msra.mxu0 %v121
    %252 = vmatprep.subr.mxu0 0.0
    %253 = vmatpush1.msra.mxu0 %v122
    %254 = vmatprep.subr.mxu0 0.0
    %255 = vmatpush1.msra.mxu0 %v123
    %256 = vmatprep.subr.mxu0 0.0
    %257 = vmatpush1.msra.mxu0 %v124
    %258 = vmatprep.subr.mxu0 0.0
    %259 = vmatpush1.msra.mxu0 %v125
    %260 = vmatprep.subr.mxu0 0.0
    %261 = vmatpush1.msra.mxu0 %v126
    %262 = vmatprep.mubr.f32.mxu0 %v84
    %263 = vmatmul.mubr.f32.gmra.mrb[0].mxu0 %v83
    %v264 = vpop.f32.mrb[0].mxu0
    %v265 = vadd.f32 %v196, %v264
    %v266 = vpop.f32.mrb[0].mxu0
    %267 = vmatprep.mubr.f32.mxu0 %v90
    %268 = vmatmul.mubr.f32.gmra.mrb[0].mxu0 %v89
    %v269 = vpop.f32.mrb[0].mxu0
    %v270 = vadd.f32 %v196, %v269
    %v271 = vpop.f32.mrb[0].mxu0
    %272 = vdwg.mxu0
    %273 = vmatprep.subr.mxu0 0.0
    %274 = vmatpush1.msra.mxu0 %v127
    %275 = vmatprep.subr.mxu0 0.0
    %276 = vmatpush1.msra.mxu0 %v128
    %277 = vmatprep.subr.mxu0 0.0
    %278 = vmatpush1.msra.mxu0 %v129
    %279 = vmatprep.subr.mxu0 0.0
    %280 = vmatpush1.msra.mxu0 %v130
    %281 = vmatprep.subr.mxu0 0.0
    %282 = vmatpush1.msra.mxu0 %v131
    %283 = vmatprep.subr.mxu0 0.0
    %284 = vmatpush1.msra.mxu0 %v132
    %285 = vmatprep.subr.mxu0 0.0
    %286 = vmatpush1.msra.mxu0 %v133
    %287 = vmatprep.subr.mxu0 0.0
    %288 = vmatpush1.msra.mxu0 %v134
    %289 = vmatprep.subr.mxu0 0.0
    %290 = vmatpush1.msra.mxu0 %v135
    %291 = vmatprep.subr.mxu0 0.0
    %292 = vmatpush1.msra.mxu0 %v136
    %293 = vmatprep.subr.mxu0 0.0
    %294 = vmatpush1.msra.mxu0 %v137
    %295 = vmatprep.subr.mxu0 0.0
    %296 = vmatpush1.msra.mxu0 %v138
    %297 = vmatprep.subr.mxu0 0.0
    %298 = vmatpush1.msra.mxu0 %v139
    %299 = vmatprep.subr.mxu0 0.0
    %300 = vmatpush1.msra.mxu0 %v140
    %301 = vmatprep.subr.mxu0 0.0
    %302 = vmatpush1.msra.mxu0 %v141
    %303 = vmatprep.subr.mxu0 0.0
    %304 = vmatpush1.msra.mxu0 %v142
    %305 = vmatprep.subr.mxu0 0.0
    %306 = vmatpush1.msra.mxu0 %v143
    %307 = vmatprep.subr.mxu0 0.0
    %308 = vmatpush1.msra.mxu0 %v144
    %309 = vmatprep.subr.mxu0 0.0
    %310 = vmatpush1.msra.mxu0 %v145
    %311 = vmatprep.subr.mxu0 0.0
    %312 = vmatpush1.msra.mxu0 %v146
    %313 = vmatprep.subr.mxu0 0.0
    %314 = vmatpush1.msra.mxu0 %v147
    %315 = vmatprep.subr.mxu0 0.0
    %316 = vmatpush1.msra.mxu0 %v148
    %317 = vmatprep.subr.mxu0 0.0
    %318 = vmatpush1.msra.mxu0 %v149
    %319 = vmatprep.subr.mxu0 0.0
    %320 = vmatpush1.msra.mxu0 %v150
    %321 = vmatprep.subr.mxu0 0.0
    %322 = vmatpush1.msra.mxu0 %v151
    %323 = vmatprep.subr.mxu0 0.0
    %324 = vmatpush1.msra.mxu0 %v152
    %325 = vmatprep.subr.mxu0 0.0
    %326 = vmatpush1.msra.mxu0 %v153
    %327 = vmatprep.subr.mxu0 0.0
    %328 = vmatpush1.msra.mxu0 %v154
    %329 = vmatprep.subr.mxu0 0.0
    %330 = vmatpush1.msra.mxu0 %v155
    %331 = vmatprep.subr.mxu0 0.0
    %332 = vmatpush1.msra.mxu0 %v156
    %333 = vmatprep.subr.mxu0 0.0
    %334 = vmatpush1.msra.mxu0 %v157
    %335 = vmatprep.subr.mxu0 0.0
    %336 = vmatpush1.msra.mxu0 %v158
    %337 = vmatprep.mubr.f32.mxu0 %v86
    %338 = vmatmul.mubr.f32.gmra.mrb[0].mxu0 %v85
    %v339 = vpop.f32.mrb[0].mxu0
    %v340 = vadd.f32 %v265, %v339
    %v341 = vpop.f32.mrb[0].mxu0
    %342 = vmatprep.mubr.f32.mxu0 %v92
    %343 = vmatmul.mubr.f32.gmra.mrb[0].mxu0 %v91
    %v344 = vpop.f32.mrb[0].mxu0
    %v345 = vadd.f32 %v270, %v344
    %v346 = vpop.f32.mrb[0].mxu0
    %347 = vdwg.mxu0
    %348 = vmatprep.subr.mxu0 0.0
    %349 = vmatpush1.msra.mxu0 %v159
    %350 = vmatprep.subr.mxu0 0.0
    %351 = vmatpush1.msra.mxu0 %v160
    %352 = vmatprep.subr.mxu0 0.0
    %353 = vmatpush1.msra.mxu0 %v161
    %354 = vmatprep.subr.mxu0 0.0
    %355 = vmatpush1.msra.mxu0 %v162
    %356 = vmatprep.subr.mxu0 0.0
    %357 = vmatpush1.msra.mxu0 %v163
    %358 = vmatprep.subr.mxu0 0.0
    %359 = vmatpush1.msra.mxu0 %v164
    %360 = vmatprep.subr.mxu0 0.0
    %361 = vmatpush1.msra.mxu0 %v165
    %362 = vmatprep.subr.mxu0 0.0
    %363 = vmatpush1.msra.mxu0 %v166
    %364 = vmatprep.subr.mxu0 0.0
    %365 = vmatpush1.msra.mxu0 %v167
    %366 = vmatprep.subr.mxu0 0.0
    %367 = vmatpush1.msra.mxu0 %v168
    %368 = vmatprep.subr.mxu0 0.0
    %369 = vmatpush1.msra.mxu0 %v169
    %370 = vmatprep.subr.mxu0 0.0
    %371 = vmatpush1.msra.mxu0 %v170
    %372 = vmatprep.subr.mxu0 0.0
    %373 = vmatpush1.msra.mxu0 %v171
    %374 = vmatprep.subr.mxu0 0.0
    %375 = vmatpush1.msra.mxu0 %v172
    %376 = vmatprep.subr.mxu0 0.0
    %377 = vmatpush1.msra.mxu0 %v173
    %378 = vmatprep.subr.mxu0 0.0
    %379 = vmatpush1.msra.mxu0 %v174
    %380 = vmatprep.subr.mxu0 0.0
    %381 = vmatpush1.msra.mxu0 %v175
    %382 = vmatprep.subr.mxu0 0.0
    %383 = vmatpush1.msra.mxu0 %v176
    %384 = vmatprep.subr.mxu0 0.0
    %385 = vmatpush1.msra.mxu0 %v177
    %386 = vmatprep.subr.mxu0 0.0
    %387 = vmatpush1.msra.mxu0 %v178
    %388 = vmatprep.subr.mxu0 0.0
    %389 = vmatpush1.msra.mxu0 %v179
    %390 = vmatprep.subr.mxu0 0.0
    %391 = vmatpush1.msra.mxu0 %v180
    %392 = vmatprep.subr.mxu0 0.0
    %393 = vmatpush1.msra.mxu0 %v181
    %394 = vmatprep.subr.mxu0 0.0
    %395 = vmatpush1.msra.mxu0 %v182
    %396 = vmatprep.subr.mxu0 0.0
    %397 = vmatpush1.msra.mxu0 %v183
    %398 = vmatprep.subr.mxu0 0.0
    %399 = vmatpush1.msra.mxu0 %v184
    %400 = vmatprep.subr.mxu0 0.0
    %401 = vmatpush1.msra.mxu0 %v185
    %402 = vmatprep.subr.mxu0 0.0
    %403 = vmatpush1.msra.mxu0 %v186
    %404 = vmatprep.subr.mxu0 0.0
    %405 = vmatpush1.msra.mxu0 %v187
    %406 = vmatprep.subr.mxu0 0.0
    %407 = vmatpush1.msra.mxu0 %v188
    %408 = vmatprep.subr.mxu0 0.0
    %409 = vmatpush1.msra.mxu0 %v189
    %410 = vmatprep.subr.mxu0 0.0
    %411 = vmatpush1.msra.mxu0 %v190
    %412 = vmatprep.mubr.f32.mxu0 %v88
    %413 = vmatmul.mubr.f32.gmra.mrb[0].mxu0 %v87
    %v414 = vpop.f32.mrb[0].mxu0
    %v415 = vadd.f32 %v340, %v414
    %v416 = vpop.f32.mrb[0].mxu0
    %417 = vmatprep.mubr.f32.mxu0 %v94
    %418 = vmatmul.mubr.f32.gmra.mrb[0].mxu0 %v93
    %v419 = vpop.f32.mrb[0].mxu0
    %v420 = vadd.f32 %v345, %v419
    %v421 = vpop.f32.mrb[0].mxu0
    %422 = vdwg.mxu0
    %v423 = vmax.f32 %v415, 0.0
    %v424 = vmax.f32 %v420, 0.0
    %v425 = vld [vmem:[%s3] sm:$0xff]
    %v426 = vld [vmem:[%s3 + $0x8] sm:$0xff]
    %v427 = vld [vmem:[%s3 + $0x10] sm:$0xff]
    %v428 = vld [vmem:[%s3 + $0x18] sm:$0xff]
    %v429 = vld [vmem:[%s3 + $0x20] sm:$0xff]
    %v430 = vld [vmem:[%s3 + $0x28] sm:$0xff]
    %v431 = vld [vmem:[%s3 + $0x30] sm:$0xff]
    %v432 = vld [vmem:[%s3 + $0x38] sm:$0xff]
    %v433 = vld [vmem:[%s4] sm:$0x1]
    %v434 = vld [vmem:[%s5] sm:$0x1]
    %v435 = vld [vmem:[%s6] sm:$0x1]
    %v436 = vld [vmem:[%s7] sm:$0xff]
    %v437 = vld [vmem:[%s7 + $0x8] sm:$0xff]
    %v438 = vld [vmem:[%s7 + $0x10] sm:$0xff]
    %v439 = vld [vmem:[%s7 + $0x18] sm:$0xff]
    %v440 = vld [vmem:[%s7 + $0x20] sm:$0xff]
    %v441 = vld [vmem:[%s7 + $0x28] sm:$0xff]
    %v442 = vld [vmem:[%s7 + $0x30] sm:$0xff]
    %v443 = vld [vmem:[%s7 + $0x38] sm:$0xff]
    %v444 = vld [vmem:[%s7 + $0x40] sm:$0xff]
    %v445 = vld [vmem:[%s7 + $0x48] sm:$0xff]
    %v446 = vld [vmem:[%s7 + $0x50] sm:$0xff]
    %v447 = vld [vmem:[%s7 + $0x58] sm:$0xff]
    %v448 = vld [vmem:[%s7 + $0x60] sm:$0xff]
    %v449 = vld [vmem:[%s7 + $0x68] sm:$0xff]
    %v450 = vld [vmem:[%s7 + $0x70] sm:$0xff]
    %v451 = vld [vmem:[%s7 + $0x78] sm:$0xff]
    %v452 = vld [vmem:[%s8] sm:$0x1]
    %v454 = vlaneseq
    %v455 = vshrl.u32 %v454, 7
    %v456 = vsub.s32 0, %v455
    %v457 = vrot.slane %v433, %v456
    %vm459 = vcmask 523264
    %v461 = vsel %vm459, %v423, 0
    %v464 = vsel %vm459, %v424, 0
    %466 = vmatprep.subr.mxu0 0.0
    %467 = vmatpush1.msra.mxu0 %v425
    %468 = vmatprep.subr.mxu0 0.0
    %469 = vmatpush1.msra.mxu0 %v426
    %470 = vmatprep.subr.mxu0 0.0
    %471 = vmatpush1.msra.mxu0 %v427
    %472 = vmatprep.subr.mxu0 0.0
    %473 = vmatpush1.msra.mxu0 %v428
    %474 = vmatprep.subr.mxu0 0.0
    %475 = vmatpush1.msra.mxu0 %v429
    %476 = vmatprep.subr.mxu0 0.0
    %477 = vmatpush1.msra.mxu0 %v430
    %478 = vmatprep.subr.mxu0 0.0
    %479 = vmatpush1.msra.mxu0 %v431
    %480 = vmatprep.subr.mxu0 0.0
    %481 = vmatpush1.msra.mxu0 %v432
    %482 = vmatprep.subr.mxu0 0.0
    %483 = vmatpush1.msra.mxu0 0.0
    %484 = vmatprep.subr.mxu0 0.0
    %485 = vmatpush1.msra.mxu0 0.0
    %486 = vmatprep.subr.mxu0 0.0
    %487 = vmatpush1.msra.mxu0 0.0
    %488 = vmatprep.subr.mxu0 0.0
    %489 = vmatpush1.msra.mxu0 0.0
    %490 = vmatprep.subr.mxu0 0.0
    %491 = vmatpush1.msra.mxu0 0.0
    %492 = vmatprep.subr.mxu0 0.0
    %493 = vmatpush1.msra.mxu0 0.0
    %494 = vmatprep.subr.mxu0 0.0
    %495 = vmatpush1.msra.mxu0 0.0
    %496 = vmatprep.subr.mxu0 0.0
    %497 = vmatpush1.msra.mxu0 0.0
    %498 = vmatprep.subr.mxu0 0.0
    %499 = vmatpush1.msra.mxu0 0.0
    %500 = vmatprep.subr.mxu0 0.0
    %501 = vmatpush1.msra.mxu0 0.0
    %502 = vmatprep.subr.mxu0 0.0
    %503 = vmatpush1.msra.mxu0 0.0
    %504 = vmatprep.subr.mxu0 0.0
    %505 = vmatpush1.msra.mxu0 0.0
    %506 = vmatprep.subr.mxu0 0.0
    %507 = vmatpush1.msra.mxu0 0.0
    %508 = vmatprep.subr.mxu0 0.0
    %509 = vmatpush1.msra.mxu0 0.0
    %510 = vmatprep.subr.mxu0 0.0
    %511 = vmatpush1.msra.mxu0 0.0
    %512 = vmatprep.subr.mxu0 0.0
    %513 = vmatpush1.msra.mxu0 0.0
    %514 = vmatprep.subr.mxu0 0.0
    %515 = vmatpush1.msra.mxu0 0.0
    %516 = vmatprep.subr.mxu0 0.0
    %517 = vmatpush1.msra.mxu0 0.0
    %518 = vmatprep.subr.mxu0 0.0
    %519 = vmatpush1.msra.mxu0 0.0
    %520 = vmatprep.subr.mxu0 0.0
    %521 = vmatpush1.msra.mxu0 0.0
    %522 = vmatprep.subr.mxu0 0.0
    %523 = vmatpush1.msra.mxu0 0.0
    %524 = vmatprep.subr.mxu0 0.0
    %525 = vmatpush1.msra.mxu0 0.0
    %526 = vmatprep.subr.mxu0 0.0
    %527 = vmatpush1.msra.mxu0 0.0
    %528 = vmatprep.subr.mxu0 0.0
    %529 = vmatpush1.msra.mxu0 0.0
    %530 = vmatprep.mubr.f32.mxu0 0.0
    %531 = vmatmul.mubr.f32.gmra.mrb[0].mxu0 %v461
    %v532 = vpop.f32.mrb[0].mxu0
    %v533 = vadd.f32 %v457, %v532
    %v534 = vpop.f32.mrb[0].mxu0
    %535 = vmatprep.mubr.f32.mxu0 0.0
    %536 = vmatmul.mubr.f32.gmra.mrb[0].mxu0 %v464
    %v537 = vpop.f32.mrb[0].mxu0
    %v538 = vadd.f32 %v457, %v537
    %v539 = vpop.f32.mrb[0].mxu0
    %540 = vdwg.mxu0
    %v541 = vrot.slane %v533, 4
    %v542 = vadd.f32 %v533, %v541
    %v543 = vrot.slane %v542, 2
    %v544 = vadd.f32 %v542, %v543
    %v545 = vrot.slane %v544, 1
    %v546 = vadd.f32 %v544, %v545
    %v547 = vrcp.pop 8.0
    %v548 = vmul.f32 %v546, %v547
    %v549 = vmul.f32 %v533, %v533
    %v550 = vrot.slane %v549, 4
    %v551 = vadd.f32 %v549, %v550
    %v552 = vrot.slane %v551, 2
    %v553 = vadd.f32 %v551, %v552
    %v554 = vrot.slane %v553, 1
    %v555 = vadd.f32 %v553, %v554
    %v556 = vmul.f32 %v555, %v547
    %v557 = vmul.f32 %v548, %v548
    %v558 = vsub.f32 %v556, %v557
    %v559 = vsub.f32 %v533, %v548
    %v560 = vadd.f32 %v558, 1e-05
    %v561 = vrsqrt.pop %v560
    %v562 = vmul.f32 %v559, %v561
    %v564 = vlaneseq
    %v565 = vshrl.u32 %v564, 7
    %v566 = vsub.s32 0, %v565
    %v567 = vrot.slane %v434, %v566
    %v569 = vmul.f32 %v562, %v567
    %v571 = vlaneseq
    %v572 = vshrl.u32 %v571, 7
    %v573 = vsub.s32 0, %v572
    %v574 = vrot.slane %v435, %v573
    %v576 = vadd.f32 %v569, %v574
    %v577 = vmax.f32 %v576, 0.0
    %v578 = vrot.slane %v538, 4
    %v579 = vadd.f32 %v538, %v578
    %v580 = vrot.slane %v579, 2
    %v581 = vadd.f32 %v579, %v580
    %v582 = vrot.slane %v581, 1
    %v583 = vadd.f32 %v581, %v582
    %v584 = vmul.f32 %v583, %v547
    %v585 = vmul.f32 %v538, %v538
    %v586 = vrot.slane %v585, 4
    %v587 = vadd.f32 %v585, %v586
    %v588 = vrot.slane %v587, 2
    %v589 = vadd.f32 %v587, %v588
    %v590 = vrot.slane %v589, 1
    %v591 = vadd.f32 %v589, %v590
    %v592 = vmul.f32 %v591, %v547
    %v593 = vmul.f32 %v584, %v584
    %v594 = vsub.f32 %v592, %v593
    %v595 = vsub.f32 %v538, %v584
    %v596 = vadd.f32 %v594, 1e-05
    %v597 = vrsqrt.pop %v596
    %v598 = vmul.f32 %v595, %v597
    %v599 = vmul.f32 %v598, %v567
    %v600 = vadd.f32 %v599, %v574
    %v601 = vmax.f32 %v600, 0.0
    %v603 = vlaneseq
    %v604 = vshrl.u32 %v603, 7
    %v605 = vsub.s32 0, %v604
    %v606 = vrot.slane %v452, %v605
    %608 = vmatprep.subr.mxu0 0.0
    %609 = vmatpush1.msra.mxu0 %v436
    %610 = vmatprep.subr.mxu0 0.0
    %611 = vmatpush1.msra.mxu0 %v437
    %612 = vmatprep.subr.mxu0 0.0
    %613 = vmatpush1.msra.mxu0 %v438
    %614 = vmatprep.subr.mxu0 0.0
    %615 = vmatpush1.msra.mxu0 %v439
    %616 = vmatprep.subr.mxu0 0.0
    %617 = vmatpush1.msra.mxu0 %v440
    %618 = vmatprep.subr.mxu0 0.0
    %619 = vmatpush1.msra.mxu0 %v441
    %620 = vmatprep.subr.mxu0 0.0
    %621 = vmatpush1.msra.mxu0 %v442
    %622 = vmatprep.subr.mxu0 0.0
    %623 = vmatpush1.msra.mxu0 %v443
    %624 = vmatprep.subr.mxu0 0.0
    %625 = vmatpush1.msra.mxu0 %v444
    %626 = vmatprep.subr.mxu0 0.0
    %627 = vmatpush1.msra.mxu0 %v445
    %628 = vmatprep.subr.mxu0 0.0
    %629 = vmatpush1.msra.mxu0 %v446
    %630 = vmatprep.subr.mxu0 0.0
    %631 = vmatpush1.msra.mxu0 %v447
    %632 = vmatprep.subr.mxu0 0.0
    %633 = vmatpush1.msra.mxu0 %v448
    %634 = vmatprep.subr.mxu0 0.0
    %635 = vmatpush1.msra.mxu0 %v449
    %636 = vmatprep.subr.mxu0 0.0
    %637 = vmatpush1.msra.mxu0 %v450
    %638 = vmatprep.subr.mxu0 0.0
    %639 = vmatpush1.msra.mxu0 %v451
    %640 = vmatprep.subr.mxu0 0.0
    %641 = vmatpush1.msra.mxu0 0.0
    %642 = vmatprep.subr.mxu0 0.0
    %643 = vmatpush1.msra.mxu0 0.0
    %644 = vmatprep.subr.mxu0 0.0
    %645 = vmatpush1.msra.mxu0 0.0
    %646 = vmatprep.subr.mxu0 0.0
    %647 = vmatpush1.msra.mxu0 0.0
    %648 = vmatprep.subr.mxu0 0.0
    %649 = vmatpush1.msra.mxu0 0.0
    %650 = vmatprep.subr.mxu0 0.0
    %651 = vmatpush1.msra.mxu0 0.0
    %652 = vmatprep.subr.mxu0 0.0
    %653 = vmatpush1.msra.mxu0 0.0
    %654 = vmatprep.subr.mxu0 0.0
    %655 = vmatpush1.msra.mxu0 0.0
    %656 = vmatprep.subr.mxu0 0.0
    %657 = vmatpush1.msra.mxu0 0.0
    %658 = vmatprep.subr.mxu0 0.0
    %659 = vmatpush1.msra.mxu0 0.0
    %660 = vmatprep.subr.mxu0 0.0
    %661 = vmatpush1.msra.mxu0 0.0
    %662 = vmatprep.subr.mxu0 0.0
    %663 = vmatpush1.msra.mxu0 0.0
    %664 = vmatprep.subr.mxu0 0.0
    %665 = vmatpush1.msra.mxu0 0.0
    %666 = vmatprep.subr.mxu0 0.0
    %667 = vmatpush1.msra.mxu0 0.0
    %668 = vmatprep.subr.mxu0 0.0
    %669 = vmatpush1.msra.mxu0 0.0
    %670 = vmatprep.subr.mxu0 0.0
    %671 = vmatpush1.msra.mxu0 0.0
    %672 = vmatprep.mubr.f32.mxu0 0.0
    %673 = vmatmul.mubr.f32.gmra.mrb[0].mxu0 %v577
    %v674 = vpop.f32.mrb[0].mxu0
    %v675 = vadd.f32 %v606, %v674
    %v676 = vpop.f32.mrb[0].mxu0
    %677 = vmatprep.mubr.f32.mxu0 0.0
    %678 = vmatmul.mubr.f32.gmra.mrb[0].mxu0 %v601
    %v679 = vpop.f32.mrb[0].mxu0
    %v680 = vadd.f32 %v606, %v679
    %v681 = vpop.f32.mrb[0].mxu0
    %682 = vdwg.mxu0
    %v683 = vld [vmem:[%s9] sm:$0xff]
    %v684 = vld [vmem:[%s9 + $0x8] sm:$0xff]
    %v685 = vld [vmem:[%s9 + $0x10] sm:$0xff]
    %v686 = vld [vmem:[%s9 + $0x18] sm:$0xff]
    %v687 = vld [vmem:[%s10] sm:$0x1]
    %v688 = vld [vmem:[%s11] sm:$0x1]
    %v689 = vld [vmem:[%s12] sm:$0x1]
    %v690 = vld [vmem:[%s13] sm:$0xff]
    %v691 = vld [vmem:[%s13 + $0x8] sm:$0xff]
    %v692 = vld [vmem:[%s13 + $0x10] sm:$0xff]
    %v693 = vld [vmem:[%s13 + $0x18] sm:$0xff]
    %v694 = vld [vmem:[%s14] sm:$0x1]
    %v696 = vlaneseq
    %v697 = vshrl.u32 %v696, 7
    %v698 = vsub.s32 0, %v697
    %v699 = vrot.slane %v687, %v698
    %vm701 = vcmask 261120
    %v703 = vsel %vm701, %v675, 0
    %v706 = vsel %vm701, %v680, 0
    %708 = vmatprep.subr.mxu0 0.0
    %709 = vmatpush1.msra.mxu0 %v683
    %710 = vmatprep.subr.mxu0 0.0
    %711 = vmatpush1.msra.mxu0 %v684
    %712 = vmatprep.subr.mxu0 0.0
    %713 = vmatpush1.msra.mxu0 %v685
    %714 = vmatprep.subr.mxu0 0.0
    %715 = vmatpush1.msra.mxu0 %v686
    %716 = vmatprep.subr.mxu0 0.0
    %717 = vmatpush1.msra.mxu0 0.0
    %718 = vmatprep.subr.mxu0 0.0
    %719 = vmatpush1.msra.mxu0 0.0
    %720 = vmatprep.subr.mxu0 0.0
    %721 = vmatpush1.msra.mxu0 0.0
    %722 = vmatprep.subr.mxu0 0.0
    %723 = vmatpush1.msra.mxu0 0.0
    %724 = vmatprep.subr.mxu0 0.0
    %725 = vmatpush1.msra.mxu0 0.0
    %726 = vmatprep.subr.mxu0 0.0
    %727 = vmatpush1.msra.mxu0 0.0
    %728 = vmatprep.subr.mxu0 0.0
    %729 = vmatpush1.msra.mxu0 0.0
    %730 = vmatprep.subr.mxu0 0.0
    %731 = vmatpush1.msra.mxu0 0.0
    %732 = vmatprep.subr.mxu0 0.0
    %733 = vmatpush1.msra.mxu0 0.0
    %734 = vmatprep.subr.mxu0 0.0
    %735 = vmatpush1.msra.mxu0 0.0
    %736 = vmatprep.subr.mxu0 0.0
    %737 = vmatpush1.msra.mxu0 0.0
    %738 = vmatprep.subr.mxu0 0.0
    %739 = vmatpush1.msra.mxu0 0.0
    %740 = vmatprep.subr.mxu0 0.0
    %741 = vmatpush1.msra.mxu0 0.0
    %742 = vmatprep.subr.mxu0 0.0
    %743 = vmatpush1.msra.mxu0 0.0
    %744 = vmatprep.subr.mxu0 0.0
    %745 = vmatpush1.msra.mxu0 0.0
    %746 = vmatprep.subr.mxu0 0.0
    %747 = vmatpush1.msra.mxu0 0.0
    %748 = vmatprep.subr.mxu0 0.0
    %749 = vmatpush1.msra.mxu0 0.0
    %750 = vmatprep.subr.mxu0 0.0
    %751 = vmatpush1.msra.mxu0 0.0
    %752 = vmatprep.subr.mxu0 0.0
    %753 = vmatpush1.msra.mxu0 0.0
    %754 = vmatprep.subr.mxu0 0.0
    %755 = vmatpush1.msra.mxu0 0.0
    %756 = vmatprep.subr.mxu0 0.0
    %757 = vmatpush1.msra.mxu0 0.0
    %758 = vmatprep.subr.mxu0 0.0
    %759 = vmatpush1.msra.mxu0 0.0
    %760 = vmatprep.subr.mxu0 0.0
    %761 = vmatpush1.msra.mxu0 0.0
    %762 = vmatprep.subr.mxu0 0.0
    %763 = vmatpush1.msra.mxu0 0.0
    %764 = vmatprep.subr.mxu0 0.0
    %765 = vmatpush1.msra.mxu0 0.0
    %766 = vmatprep.subr.mxu0 0.0
    %767 = vmatpush1.msra.mxu0 0.0
    %768 = vmatprep.subr.mxu0 0.0
    %769 = vmatpush1.msra.mxu0 0.0
    %770 = vmatprep.subr.mxu0 0.0
    %771 = vmatpush1.msra.mxu0 0.0
    %772 = vmatprep.mubr.f32.mxu0 0.0
    %773 = vmatmul.mubr.f32.gmra.mrb[0].mxu0 %v703
    %v774 = vpop.f32.mrb[0].mxu0
    %v775 = vadd.f32 %v699, %v774
    %v776 = vpop.f32.mrb[0].mxu0
    %777 = vmatprep.mubr.f32.mxu0 0.0
    %778 = vmatmul.mubr.f32.gmra.mrb[0].mxu0 %v706
    %v779 = vpop.f32.mrb[0].mxu0
    %v780 = vadd.f32 %v699, %v779
    %v781 = vpop.f32.mrb[0].mxu0
    %782 = vdwg.mxu0
    %v783 = vsel %vm701, %v775, 0.0
    %v784 = vrot.slane %v783, 4
    %v785 = vadd.f32 %v783, %v784
    %v786 = vrot.slane %v785, 2
    %v787 = vadd.f32 %v785, %v786
    %v788 = vrot.slane %v787, 1
    %v789 = vadd.f32 %v787, %v788
    %v790 = vmul.f32 %v789, %v547
    %v791 = vmul.f32 %v775, %v775
    %v792 = vsel %vm701, %v791, 0.0
    %v793 = vrot.slane %v792, 4
    %v794 = vadd.f32 %v792, %v793
    %v795 = vrot.slane %v794, 2
    %v796 = vadd.f32 %v794, %v795
    %v797 = vrot.slane %v796, 1
    %v798 = vadd.f32 %v796, %v797
    %v799 = vmul.f32 %v798, %v547
    %v800 = vmul.f32 %v790, %v790
    %v801 = vsub.f32 %v799, %v800
    %v802 = vsub.f32 %v775, %v790
    %v803 = vadd.f32 %v801, 1e-05
    %v804 = vrsqrt.pop %v803
    %v805 = vmul.f32 %v802, %v804
    %v807 = vlaneseq
    %v808 = vshrl.u32 %v807, 7
    %v809 = vsub.s32 0, %v808
    %v810 = vrot.slane %v688, %v809
    %v812 = vmul.f32 %v805, %v810
    %v814 = vlaneseq
    %v815 = vshrl.u32 %v814, 7
    %v816 = vsub.s32 0, %v815
    %v817 = vrot.slane %v689, %v816
    %v819 = vadd.f32 %v812, %v817
    %v820 = vmax.f32 %v819, 0.0
    %v821 = vsel %vm701, %v780, 0.0
    %v822 = vrot.slane %v821, 4
    %v823 = vadd.f32 %v821, %v822
    %v824 = vrot.slane %v823, 2
    %v825 = vadd.f32 %v823, %v824
    %v826 = vrot.slane %v825, 1
    %v827 = vadd.f32 %v825, %v826
    %v828 = vmul.f32 %v827, %v547
    %v829 = vmul.f32 %v780, %v780
    %v830 = vsel %vm701, %v829, 0.0
    %v831 = vrot.slane %v830, 4
    %v832 = vadd.f32 %v830, %v831
    %v833 = vrot.slane %v832, 2
    %v834 = vadd.f32 %v832, %v833
    %v835 = vrot.slane %v834, 1
    %v836 = vadd.f32 %v834, %v835
    %v837 = vmul.f32 %v836, %v547
    %v838 = vmul.f32 %v828, %v828
    %v839 = vsub.f32 %v837, %v838
    %v840 = vsub.f32 %v780, %v828
    %v841 = vadd.f32 %v839, 1e-05
    %v842 = vrsqrt.pop %v841
    %v843 = vmul.f32 %v840, %v842
    %v844 = vmul.f32 %v843, %v810
    %v845 = vadd.f32 %v844, %v817
    %v846 = vmax.f32 %v845, 0.0
    %v848 = vlaneseq
    %v849 = vshrl.u32 %v848, 7
    %v850 = vsub.s32 0, %v849
    %v851 = vrot.slane %v694, %v850
    %v854 = vsel %vm701, %v820, 0
    %v857 = vsel %vm701, %v846, 0
    %859 = vmatprep.subr.mxu0 0.0
    %860 = vmatpush1.msra.mxu0 %v690
    %861 = vmatprep.subr.mxu0 0.0
    %862 = vmatpush1.msra.mxu0 %v691
    %863 = vmatprep.subr.mxu0 0.0
    %864 = vmatpush1.msra.mxu0 %v692
    %865 = vmatprep.subr.mxu0 0.0
    %866 = vmatpush1.msra.mxu0 %v693
    %867 = vmatprep.subr.mxu0 0.0
    %868 = vmatpush1.msra.mxu0 0.0
    %869 = vmatprep.subr.mxu0 0.0
    %870 = vmatpush1.msra.mxu0 0.0
    %871 = vmatprep.subr.mxu0 0.0
    %872 = vmatpush1.msra.mxu0 0.0
    %873 = vmatprep.subr.mxu0 0.0
    %874 = vmatpush1.msra.mxu0 0.0
    %875 = vmatprep.subr.mxu0 0.0
    %876 = vmatpush1.msra.mxu0 0.0
    %877 = vmatprep.subr.mxu0 0.0
    %878 = vmatpush1.msra.mxu0 0.0
    %879 = vmatprep.subr.mxu0 0.0
    %880 = vmatpush1.msra.mxu0 0.0
    %881 = vmatprep.subr.mxu0 0.0
    %882 = vmatpush1.msra.mxu0 0.0
    %883 = vmatprep.subr.mxu0 0.0
    %884 = vmatpush1.msra.mxu0 0.0
    %885 = vmatprep.subr.mxu0 0.0
    %886 = vmatpush1.msra.mxu0 0.0
    %887 = vmatprep.subr.mxu0 0.0
    %888 = vmatpush1.msra.mxu0 0.0
    %889 = vmatprep.subr.mxu0 0.0
    %890 = vmatpush1.msra.mxu0 0.0
    %891 = vmatprep.subr.mxu0 0.0
    %892 = vmatpush1.msra.mxu0 0.0
    %893 = vmatprep.subr.mxu0 0.0
    %894 = vmatpush1.msra.mxu0 0.0
    %895 = vmatprep.subr.mxu0 0.0
    %896 = vmatpush1.msra.mxu0 0.0
    %897 = vmatprep.subr.mxu0 0.0
    %898 = vmatpush1.msra.mxu0 0.0
    %899 = vmatprep.subr.mxu0 0.0
    %900 = vmatpush1.msra.mxu0 0.0
    %901 = vmatprep.subr.mxu0 0.0
    %902 = vmatpush1.msra.mxu0 0.0
    %903 = vmatprep.subr.mxu0 0.0
    %904 = vmatpush1.msra.mxu0 0.0
    %905 = vmatprep.subr.mxu0 0.0
    %906 = vmatpush1.msra.mxu0 0.0
    %907 = vmatprep.subr.mxu0 0.0
    %908 = vmatpush1.msra.mxu0 0.0
    %909 = vmatprep.subr.mxu0 0.0
    %910 = vmatpush1.msra.mxu0 0.0
    %911 = vmatprep.subr.mxu0 0.0
    %912 = vmatpush1.msra.mxu0 0.0
    %913 = vmatprep.subr.mxu0 0.0
    %914 = vmatpush1.msra.mxu0 0.0
    %915 = vmatprep.subr.mxu0 0.0
    %916 = vmatpush1.msra.mxu0 0.0
    %917 = vmatprep.subr.mxu0 0.0
    %918 = vmatpush1.msra.mxu0 0.0
    %919 = vmatprep.subr.mxu0 0.0
    %920 = vmatpush1.msra.mxu0 0.0
    %921 = vmatprep.subr.mxu0 0.0
    %922 = vmatpush1.msra.mxu0 0.0
    %923 = vmatprep.mubr.f32.mxu0 0.0
    %924 = vmatmul.mubr.f32.gmra.mrb[0].mxu0 %v854
    %v925 = vpop.f32.mrb[0].mxu0
    %v926 = vadd.f32 %v851, %v925
    %v927 = vpop.f32.mrb[0].mxu0
    %928 = vmatprep.mubr.f32.mxu0 0.0
    %929 = vmatmul.mubr.f32.gmra.mrb[0].mxu0 %v857
    %v930 = vpop.f32.mrb[0].mxu0
    %v931 = vadd.f32 %v851, %v930
    %v932 = vpop.f32.mrb[0].mxu0
    %933 = vdwg.mxu0
    %v934 = vld [vmem:[%s15] sm:$0xff]
    %v935 = vld [vmem:[%s15 + $0x8] sm:$0xff]
    %v936 = vld [vmem:[%s15 + $0x10] sm:$0xff]
    %v937 = vld [vmem:[%s15 + $0x18] sm:$0xff]
    %v938 = vld [vmem:[%s15 + $0x20] sm:$0xff]
    %v939 = vld [vmem:[%s15 + $0x28] sm:$0xff]
    %v940 = vld [vmem:[%s15 + $0x30] sm:$0xff]
    %v941 = vld [vmem:[%s15 + $0x38] sm:$0xff]
    %v942 = vld [vmem:[%s16] sm:$0x1]
    %v943 = vld [vmem:[%s17] sm:$0x1]
    %v944 = vld [vmem:[%s18] sm:$0x1]
    %v945 = vld [vmem:[%s19] sm:$0xff]
    %v946 = vld [vmem:[%s19 + $0x8] sm:$0xff]
    %v947 = vld [vmem:[%s19 + $0x10] sm:$0xff]
    %v948 = vld [vmem:[%s19 + $0x18] sm:$0xff]
    %v949 = vld [vmem:[%s19 + $0x20] sm:$0xff]
    %v950 = vld [vmem:[%s19 + $0x28] sm:$0xff]
    %v951 = vld [vmem:[%s19 + $0x30] sm:$0xff]
    %v952 = vld [vmem:[%s19 + $0x38] sm:$0xff]
    %v953 = vld [vmem:[%s19 + $0x40] sm:$0xff]
    %v954 = vld [vmem:[%s19 + $0x48] sm:$0xff]
    %v955 = vld [vmem:[%s19 + $0x50] sm:$0xff]
    %v956 = vld [vmem:[%s19 + $0x58] sm:$0xff]
    %v957 = vld [vmem:[%s19 + $0x60] sm:$0xff]
    %v958 = vld [vmem:[%s19 + $0x68] sm:$0xff]
    %v959 = vld [vmem:[%s19 + $0x70] sm:$0xff]
    %v960 = vld [vmem:[%s19 + $0x78] sm:$0xff]
    %v961 = vld [vmem:[%s20] sm:$0x1]
    %v963 = vlaneseq
    %v964 = vshrl.u32 %v963, 7
    %v965 = vsub.s32 0, %v964
    %v966 = vrot.slane %v942, %v965
    %968 = vrot.lane.b32.xlu0 %v423, 64
    %v969 = vpop.permute.xlu0 %968
    %970 = vrot.lane.b32.xlu0 %v424, 64
    %v971 = vpop.permute.xlu0 %970
    %v972 = vsel %vm459, %v969, 0
    %v974 = vsel %vm459, %v971, 0
    %976 = vmatprep.subr.mxu0 0.0
    %977 = vmatpush1.msra.mxu0 %v934
    %978 = vmatprep.subr.mxu0 0.0
    %979 = vmatpush1.msra.mxu0 %v935
    %980 = vmatprep.subr.mxu0 0.0
    %981 = vmatpush1.msra.mxu0 %v936
    %982 = vmatprep.subr.mxu0 0.0
    %983 = vmatpush1.msra.mxu0 %v937
    %984 = vmatprep.subr.mxu0 0.0
    %985 = vmatpush1.msra.mxu0 %v938
    %986 = vmatprep.subr.mxu0 0.0
    %987 = vmatpush1.msra.mxu0 %v939
    %988 = vmatprep.subr.mxu0 0.0
    %989 = vmatpush1.msra.mxu0 %v940
    %990 = vmatprep.subr.mxu0 0.0
    %991 = vmatpush1.msra.mxu0 %v941
    %992 = vmatprep.subr.mxu0 0.0
    %993 = vmatpush1.msra.mxu0 0.0
    %994 = vmatprep.subr.mxu0 0.0
    %995 = vmatpush1.msra.mxu0 0.0
    %996 = vmatprep.subr.mxu0 0.0
    %997 = vmatpush1.msra.mxu0 0.0
    %998 = vmatprep.subr.mxu0 0.0
    %999 = vmatpush1.msra.mxu0 0.0
    %1000 = vmatprep.subr.mxu0 0.0
    %1001 = vmatpush1.msra.mxu0 0.0
    %1002 = vmatprep.subr.mxu0 0.0
    %1003 = vmatpush1.msra.mxu0 0.0
    %1004 = vmatprep.subr.mxu0 0.0
    %1005 = vmatpush1.msra.mxu0 0.0
    %1006 = vmatprep.subr.mxu0 0.0
    %1007 = vmatpush1.msra.mxu0 0.0
    %1008 = vmatprep.subr.mxu0 0.0
    %1009 = vmatpush1.msra.mxu0 0.0
    %1010 = vmatprep.subr.mxu0 0.0
    %1011 = vmatpush1.msra.mxu0 0.0
    %1012 = vmatprep.subr.mxu0 0.0
    %1013 = vmatpush1.msra.mxu0 0.0
    %1014 = vmatprep.subr.mxu0 0.0
    %1015 = vmatpush1.msra.mxu0 0.0
    %1016 = vmatprep.subr.mxu0 0.0
    %1017 = vmatpush1.msra.mxu0 0.0
    %1018 = vmatprep.subr.mxu0 0.0
    %1019 = vmatpush1.msra.mxu0 0.0
    %1020 = vmatprep.subr.mxu0 0.0
    %1021 = vmatpush1.msra.mxu0 0.0
    %1022 = vmatprep.subr.mxu0 0.0
    %1023 = vmatpush1.msra.mxu0 0.0
    %1024 = vmatprep.subr.mxu0 0.0
    %1025 = vmatpush1.msra.mxu0 0.0
    %1026 = vmatprep.subr.mxu0 0.0
    %1027 = vmatpush1.msra.mxu0 0.0
    %1028 = vmatprep.subr.mxu0 0.0
    %1029 = vmatpush1.msra.mxu0 0.0
    %1030 = vmatprep.subr.mxu0 0.0
    %1031 = vmatpush1.msra.mxu0 0.0
    %1032 = vmatprep.subr.mxu0 0.0
    %1033 = vmatpush1.msra.mxu0 0.0
    %1034 = vmatprep.subr.mxu0 0.0
    %1035 = vmatpush1.msra.mxu0 0.0
    %1036 = vmatprep.subr.mxu0 0.0
    %1037 = vmatpush1.msra.mxu0 0.0
    %1038 = vmatprep.subr.mxu0 0.0
    %1039 = vmatpush1.msra.mxu0 0.0
    %1040 = vmatprep.mubr.f32.mxu0 0.0
    %1041 = vmatmul.mubr.f32.gmra.mrb[0].mxu0 %v972
    %v1042 = vpop.f32.mrb[0].mxu0
    %v1043 = vadd.f32 %v966, %v1042
    %v1044 = vpop.f32.mrb[0].mxu0
    %1045 = vmatprep.mubr.f32.mxu0 0.0
    %1046 = vmatmul.mubr.f32.gmra.mrb[0].mxu0 %v974
    %v1047 = vpop.f32.mrb[0].mxu0
    %v1048 = vadd.f32 %v966, %v1047
    %v1049 = vpop.f32.mrb[0].mxu0
    %1050 = vdwg.mxu0
    %v1051 = vrot.slane %v1043, 4
    %v1052 = vadd.f32 %v1043, %v1051
    %v1053 = vrot.slane %v1052, 2
    %v1054 = vadd.f32 %v1052, %v1053
    %v1055 = vrot.slane %v1054, 1
    %v1056 = vadd.f32 %v1054, %v1055
    %v1057 = vmul.f32 %v1056, %v547
    %v1058 = vmul.f32 %v1043, %v1043
    %v1059 = vrot.slane %v1058, 4
    %v1060 = vadd.f32 %v1058, %v1059
    %v1061 = vrot.slane %v1060, 2
    %v1062 = vadd.f32 %v1060, %v1061
    %v1063 = vrot.slane %v1062, 1
    %v1064 = vadd.f32 %v1062, %v1063
    %v1065 = vmul.f32 %v1064, %v547
    %v1066 = vmul.f32 %v1057, %v1057
    %v1067 = vsub.f32 %v1065, %v1066
    %v1068 = vsub.f32 %v1043, %v1057
    %v1069 = vadd.f32 %v1067, 1e-05
    %v1070 = vrsqrt.pop %v1069
    %v1071 = vmul.f32 %v1068, %v1070
    %v1073 = vlaneseq
    %v1074 = vshrl.u32 %v1073, 7
    %v1075 = vsub.s32 0, %v1074
    %v1076 = vrot.slane %v943, %v1075
    %v1078 = vmul.f32 %v1071, %v1076
    %v1080 = vlaneseq
    %v1081 = vshrl.u32 %v1080, 7
    %v1082 = vsub.s32 0, %v1081
    %v1083 = vrot.slane %v944, %v1082
    %v1085 = vadd.f32 %v1078, %v1083
    %v1086 = vmax.f32 %v1085, 0.0
    %v1087 = vrot.slane %v1048, 4
    %v1088 = vadd.f32 %v1048, %v1087
    %v1089 = vrot.slane %v1088, 2
    %v1090 = vadd.f32 %v1088, %v1089
    %v1091 = vrot.slane %v1090, 1
    %v1092 = vadd.f32 %v1090, %v1091
    %v1093 = vmul.f32 %v1092, %v547
    %v1094 = vmul.f32 %v1048, %v1048
    %v1095 = vrot.slane %v1094, 4
    %v1096 = vadd.f32 %v1094, %v1095
    %v1097 = vrot.slane %v1096, 2
    %v1098 = vadd.f32 %v1096, %v1097
    %v1099 = vrot.slane %v1098, 1
    %v1100 = vadd.f32 %v1098, %v1099
    %v1101 = vmul.f32 %v1100, %v547
    %v1102 = vmul.f32 %v1093, %v1093
    %v1103 = vsub.f32 %v1101, %v1102
    %v1104 = vsub.f32 %v1048, %v1093
    %v1105 = vadd.f32 %v1103, 1e-05
    %v1106 = vrsqrt.pop %v1105
    %v1107 = vmul.f32 %v1104, %v1106
    %v1108 = vmul.f32 %v1107, %v1076
    %v1109 = vadd.f32 %v1108, %v1083
    %v1110 = vmax.f32 %v1109, 0.0
    %v1112 = vlaneseq
    %v1113 = vshrl.u32 %v1112, 7
    %v1114 = vsub.s32 0, %v1113
    %v1115 = vrot.slane %v961, %v1114
    %1117 = vmatprep.subr.mxu0 0.0
    %1118 = vmatpush1.msra.mxu0 %v945
    %1119 = vmatprep.subr.mxu0 0.0
    %1120 = vmatpush1.msra.mxu0 %v946
    %1121 = vmatprep.subr.mxu0 0.0
    %1122 = vmatpush1.msra.mxu0 %v947
    %1123 = vmatprep.subr.mxu0 0.0
    %1124 = vmatpush1.msra.mxu0 %v948
    %1125 = vmatprep.subr.mxu0 0.0
    %1126 = vmatpush1.msra.mxu0 %v949
    %1127 = vmatprep.subr.mxu0 0.0
    %1128 = vmatpush1.msra.mxu0 %v950
    %1129 = vmatprep.subr.mxu0 0.0
    %1130 = vmatpush1.msra.mxu0 %v951
    %1131 = vmatprep.subr.mxu0 0.0
    %1132 = vmatpush1.msra.mxu0 %v952
    %1133 = vmatprep.subr.mxu0 0.0
    %1134 = vmatpush1.msra.mxu0 %v953
    %1135 = vmatprep.subr.mxu0 0.0
    %1136 = vmatpush1.msra.mxu0 %v954
    %1137 = vmatprep.subr.mxu0 0.0
    %1138 = vmatpush1.msra.mxu0 %v955
    %1139 = vmatprep.subr.mxu0 0.0
    %1140 = vmatpush1.msra.mxu0 %v956
    %1141 = vmatprep.subr.mxu0 0.0
    %1142 = vmatpush1.msra.mxu0 %v957
    %1143 = vmatprep.subr.mxu0 0.0
    %1144 = vmatpush1.msra.mxu0 %v958
    %1145 = vmatprep.subr.mxu0 0.0
    %1146 = vmatpush1.msra.mxu0 %v959
    %1147 = vmatprep.subr.mxu0 0.0
    %1148 = vmatpush1.msra.mxu0 %v960
    %1149 = vmatprep.subr.mxu0 0.0
    %1150 = vmatpush1.msra.mxu0 0.0
    %1151 = vmatprep.subr.mxu0 0.0
    %1152 = vmatpush1.msra.mxu0 0.0
    %1153 = vmatprep.subr.mxu0 0.0
    %1154 = vmatpush1.msra.mxu0 0.0
    %1155 = vmatprep.subr.mxu0 0.0
    %1156 = vmatpush1.msra.mxu0 0.0
    %1157 = vmatprep.subr.mxu0 0.0
    %1158 = vmatpush1.msra.mxu0 0.0
    %1159 = vmatprep.subr.mxu0 0.0
    %1160 = vmatpush1.msra.mxu0 0.0
    %1161 = vmatprep.subr.mxu0 0.0
    %1162 = vmatpush1.msra.mxu0 0.0
    %1163 = vmatprep.subr.mxu0 0.0
    %1164 = vmatpush1.msra.mxu0 0.0
    %1165 = vmatprep.subr.mxu0 0.0
    %1166 = vmatpush1.msra.mxu0 0.0
    %1167 = vmatprep.subr.mxu0 0.0
    %1168 = vmatpush1.msra.mxu0 0.0
    %1169 = vmatprep.subr.mxu0 0.0
    %1170 = vmatpush1.msra.mxu0 0.0
    %1171 = vmatprep.subr.mxu0 0.0
    %1172 = vmatpush1.msra.mxu0 0.0
    %1173 = vmatprep.subr.mxu0 0.0
    %1174 = vmatpush1.msra.mxu0 0.0
    %1175 = vmatprep.subr.mxu0 0.0
    %1176 = vmatpush1.msra.mxu0 0.0
    %1177 = vmatprep.subr.mxu0 0.0
    %1178 = vmatpush1.msra.mxu0 0.0
    %1179 = vmatprep.subr.mxu0 0.0
    %1180 = vmatpush1.msra.mxu0 0.0
    %1181 = vmatprep.mubr.f32.mxu0 0.0
    %1182 = vmatmul.mubr.f32.gmra.mrb[0].mxu0 %v1086
    %v1183 = vpop.f32.mrb[0].mxu0
    %v1184 = vadd.f32 %v1115, %v1183
    %v1185 = vpop.f32.mrb[0].mxu0
    %1186 = vmatprep.mubr.f32.mxu0 0.0
    %1187 = vmatmul.mubr.f32.gmra.mrb[0].mxu0 %v1110
    %v1188 = vpop.f32.mrb[0].mxu0
    %v1189 = vadd.f32 %v1115, %v1188
    %v1190 = vpop.f32.mrb[0].mxu0
    %1191 = vdwg.mxu0
    %1193 = vrot.lane.b32.xlu0 %v931, 32
    %v1194 = vpop.permute.xlu0 %1193
    %1197 = vrot.lane.b32.xlu0 %v1184, 64
    %v1198 = vpop.permute.xlu0 %1197
    %1201 = vrot.lane.b32.xlu0 %v1189, 96
    %v1202 = vpop.permute.xlu0 %1201
    %v1204 = vsel %vm701, %v926, %v1194
    %v1205 = vsel %vm459, %v1204, %v1198
    %vm1206 = vcmask 785408
    %v1207 = vsel %vm1206, %v1205, %v1202
    %1208 = vst [vmem:[#allocation5] sm:$0xff] %v1207
    // Predicated region
    $region90: #{tpu_custom_call.1} parent=1 // pred_check
      _
    $region91: #{tpu_custom_call.1} parent=1 // pred_check_branch
      %1210 = sbr.rel (0) target = $region93
    $region92: #{tpu_custom_call.1} parent=1 // pred_region
      %s1212 = ssub.s32 128, 128
      %1213 = vsyncadd [#allocation4], %s1212
      %s1215 = sshll.u32 [#allocation5], 4
      %s1216 = int_to_ptr.vmem [resolvable:$true] %s1215
      %1218 = dma.vmem_to_hbm [thread:$0]  %s1216, 128, %s21, [#allocation4]
    $region93: #{tpu_custom_call.1} parent=1 // pred_fallthru
      _
    // Predicated region
    $region94: #{tpu_custom_call.1} parent=1 // pred_check
      _
    $region95: #{tpu_custom_call.1} parent=1 // pred_check_branch
      %1220 = sbr.rel (0) target = $region97
    $region96: #{tpu_custom_call.1} parent=1 // pred_region
      %1221 = dma.done [#allocation4], 128
    $region97: #{tpu_custom_call.1} parent=1 // pred_fallthru
      _
    %1222 = vsyncpa [#allocation3], 1
    %1223 = vsyncpa [#allocation4], 1

</llo_original>
